<compile_context>
chip_gen: v7x
topology: tpu7x:2x2x1
jax: 0.10.0
libtpu: 0.0.40
codegen_flags: <defaults>
</compile_context>

<pallas_src>
import jax
import jax.numpy as jnp
from jax import lax
from jax.experimental import pallas as pl
from jax.experimental.pallas import tpu as pltpu


def _make_nlm_kernel(batch_block, temp, n_valid_rows, has_row_padding):
    temp = float(temp)

    def kernel(x1_ref, x2_ref, out_ref):
        # x1_ref:  (BB, Cp, Np)  -- all rows (queries) of this batch block
        # x2_ref:  (BB, Cp, TJ)  -- one lane-dense column tile
        # out_ref: (BB, Np, TJ)
        for b in range(batch_block):  # small static unroll (BB <= 8)
            # affinity[i, j] = sum_c x1[c, i] * x2[c, j]  (MXU, f32 accumulate)
            a = lax.dot_general(
                x1_ref[b], x2_ref[b],
                dimension_numbers=(((0,), (0,)), ((), ())),
                preferred_element_type=jnp.float32,
            )  # (Np, TJ)
            if temp != 1.0:
                a = a * temp
            if has_row_padding:
                # zero-padded rows must not contribute to the softmax denominator
                ri = lax.broadcasted_iota(jnp.int32, a.shape, 0)
                a = jnp.where(ri < n_valid_rows, a, -1e30)

            # softmax over rows (axis 0 of the tile == dim 1 of the output)
            m = jnp.max(a, axis=0, keepdims=True)            # (1, TJ)
            out_ref[b] = jnp.exp(a - m)                      # out_ref doubles as scratch
            s = jnp.sum(out_ref[b], axis=0, keepdims=True)   # (1, TJ)
            inv = pl.reciprocal(s, approx=True)              # EUP, avoids N^2 divides
            inv = inv * (2.0 - s * inv)                      # one Newton step -> f32 accurate
            out_ref[b] = out_ref[b] * inv

    return kernel


def nlm_forward(in1, in2, temp=1.0, l2_norm=False):
    """NLM_dot forward: two (n, c, h, w) inputs -> softmax affinity (n, N, N), N = h*w."""
    n, c, h, w = in1.shape
    N = h * w
    x1 = in1.reshape(n, c, N).astype(jnp.float32)
    x2 = in2.reshape(n, c, N).astype(jnp.float32)

    if l2_norm:  # featureL2Norm: x / sqrt(sum_c x^2 + eps); cheap O(c*N) wrapper-side op
        eps = 1e-6
        x1 = x1 * lax.rsqrt(jnp.sum(x1 * x1, axis=1, keepdims=True) + eps)
        x2 = x2 * lax.rsqrt(jnp.sum(x2 * x2, axis=1, keepdims=True) + eps)
    # TODO(synk): is_norm=True path (lazy LayerNorm with data-shaped parameters) is not
    # implemented; the module default is is_norm=False.

    # Pad to TPU-friendly shapes: channels -> multiple of 8 (f32 sublane),
    # N -> multiple of 128 (lane-dense, unmasked output stores).
    c_pad = -c % 8
    n_pad = -N % 128
    if c_pad or n_pad:
        x1 = jnp.pad(x1, ((0, 0), (0, c_pad), (0, n_pad)))
        x2 = jnp.pad(x2, ((0, 0), (0, c_pad), (0, n_pad)))
    Cp = c + c_pad
    Np = N + n_pad

    # Estimated per-batch-element VMEM footprint for a given column tile:
    # double-buffered x1/x2/out blocks + ~2 live (Np, TJ) f32 temporaries.
    def footprint(tj, bb):
        return bb * 4 * (2 * (Cp * Np + Cp * tj + Np * tj) + 2 * Np * tj)

    budget_bytes = 12 * 1024 * 1024  # fits comfortably on v5e/v6e/v7x scoped VMEM

    # Column tile: largest lane-dense tile (<=512) that divides Np and fits the budget.
    TJ = 128
    for t in (512, 384, 256):
        if Np % t == 0 and footprint(t, 1) <= budget_bytes:
            TJ = t
            break

    # Batch block: amortize per-grid-step pipeline overhead for small N.
    BB = 1
    for b in range(1, min(n, 8) + 1):
        if n % b == 0 and footprint(TJ, b) <= budget_bytes:
            BB = b

    kernel = _make_nlm_kernel(BB, temp, N, n_pad > 0)

    out = pl.pallas_call(
        kernel,
        out_shape=jax.ShapeDtypeStruct((n, Np, Np), jnp.float32),
        grid_spec=pltpu.PrefetchScalarGridSpec(
            num_scalar_prefetch=0,
            grid=(n // BB, Np // TJ),
            in_specs=[
                pl.BlockSpec((BB, Cp, Np), lambda b, j: (b, 0, 0)),  # all rows, reused over j
                pl.BlockSpec((BB, Cp, TJ), lambda b, j: (b, 0, j)),  # column tile
            ],
            out_specs=pl.BlockSpec((BB, Np, TJ), lambda b, j: (b, 0, j)),
        ),
        compiler_params=pltpu.CompilerParams(
            dimension_semantics=("parallel", "parallel"),
            vmem_limit_bytes=32 * 1024 * 1024,
        ),
    )(x1, x2)

    if n_pad:
        out = out[:, :N, :N]
    return out


def nlm_reference(in1, in2, temp=1.0, l2_norm=False):
    """Pure-JAX reference mirroring NLM_dot.forward."""
    n, c, h, w = in1.shape
    N = h * w
    x1 = in1.reshape(n, c, N).astype(jnp.float32)
    x2 = in2.reshape(n, c, N).astype(jnp.float32)
    if l2_norm:
        eps = 1e-6
        x1 = x1 / jnp.sqrt(jnp.sum(x1 * x1, axis=1, keepdims=True) + eps)
        x2 = x2 / jnp.sqrt(jnp.sum(x2 * x2, axis=1, keepdims=True) + eps)
    aff = jnp.einsum("bci,bcj->bij", x1, x2) * temp
    return jax.nn.softmax(aff, axis=1)


if __name__ == "__main__":
    key = jax.random.PRNGKey(0)
    k1, k2 = jax.random.split(key)
    n, c, h, w = 2, 4, 16, 16
    in1 = jax.random.normal(k1, (n, c, h, w), dtype=jnp.float32)
    in2 = jax.random.normal(k2, (n, c, h, w), dtype=jnp.float32)

    out = nlm_forward(in1, in2)
    jax.block_until_ready(out)

    ref = nlm_reference(in1, in2)
    assert out.shape == (n, h * w, h * w)
    assert bool(jnp.allclose(out, ref, atol=2e-5, rtol=2e-5)), "mismatch vs reference"
    assert bool(jnp.allclose(out.sum(axis=1), 1.0, atol=1e-4)), "softmax rows must sum to 1"

    print("KERNEL_OK")
</pallas_src>

<mosaic_0001>
module attributes {stable_mosaic.version = 11 : i64} {
  func.func @kernel(%arg0: i32, %arg1: i32, %arg2: memref<2x8x256xf32, #tpu.memory_space<vmem>>, %arg3: memref<2x8x256xf32, #tpu.memory_space<vmem>>, %arg4: memref<2x256x256xf32, #tpu.memory_space<vmem>>) attributes {dimension_semantics = [#tpu.dimension_semantics<parallel>, #tpu.dimension_semantics<parallel>], iteration_bounds = array<i64: 1, 1>, scalar_prefetch = 0 : i64, scratch_operands = 0 : i64, tpu.core_type = #tpu.core_type<tc>, window_params = [{transform_indices = @transform_0, window_bounds = array<i64: 2, 8, 256>}, {transform_indices = @transform_1, window_bounds = array<i64: 2, 8, 256>}, {transform_indices = @transform_2, window_bounds = array<i64: 2, 256, 256>}]} {
    %c0 = arith.constant 0 : index
    %c0_0 = arith.constant 0 : index
    %c0_1 = arith.constant 0 : index
    %0 = vector.load %arg2[%c0, %c0_0, %c0_1] : memref<2x8x256xf32, #tpu.memory_space<vmem>>, vector<1x8x256xf32>
    %1 = vector.shape_cast %0 : vector<1x8x256xf32> to vector<8x256xf32>
    %c0_2 = arith.constant 0 : index
    %c0_3 = arith.constant 0 : index
    %c0_4 = arith.constant 0 : index
    %2 = vector.load %arg3[%c0_2, %c0_3, %c0_4] : memref<2x8x256xf32, #tpu.memory_space<vmem>>, vector<1x8x256xf32>
    %3 = vector.shape_cast %2 : vector<1x8x256xf32> to vector<8x256xf32>
    %cst = arith.constant dense<0.000000e+00> : vector<256x256xf32>
    %4 = tpu.matmul %1, %3, %cst {dimension_numbers = #tpu.dot_dimension_numbers<[0], [0], [1], [1], [0, 1, 1, 1], [], []>} : vector<8x256xf32>, vector<8x256xf32>, vector<256x256xf32> -> vector<256x256xf32>
    %cst_5 = arith.constant dense<0xFF800000> : vector<256xf32>
    %5 = vector.multi_reduction <maximumf>, %4, %cst_5 [0] : vector<256x256xf32> to vector<256xf32>
    %6 = vector.shape_cast %5 : vector<256xf32> to vector<1x256xf32>
    %7 = vector.broadcast %6 : vector<1x256xf32> to vector<256x256xf32>
    %8 = arith.subf %4, %7 : vector<256x256xf32>
    %9 = math.exp %8 : vector<256x256xf32>
    %c0_6 = arith.constant 0 : index
    %c0_7 = arith.constant 0 : index
    %c0_8 = arith.constant 0 : index
    %10 = vector.load %arg4[%c0_6, %c0_7, %c0_8] : memref<2x256x256xf32, #tpu.memory_space<vmem>>, vector<1x256x256xf32>
    %11 = vector.shape_cast %10 : vector<1x256x256xf32> to vector<256x256xf32>
    %12 = vector.shape_cast %9 : vector<256x256xf32> to vector<1x256x256xf32>
    tpu.vector_store %arg4[%c0_6, %c0_7, %c0_8], %12 {strides = array<i32>} : memref<2x256x256xf32, #tpu.memory_space<vmem>>, vector<1x256x256xf32>,
    %c0_9 = arith.constant 0 : index
    %c0_10 = arith.constant 0 : index
    %c0_11 = arith.constant 0 : index
    %13 = vector.load %arg4[%c0_9, %c0_10, %c0_11] : memref<2x256x256xf32, #tpu.memory_space<vmem>>, vector<1x256x256xf32>
    %14 = vector.shape_cast %13 : vector<1x256x256xf32> to vector<256x256xf32>
    %cst_12 = arith.constant dense<0.000000e+00> : vector<256xf32>
    %15 = vector.multi_reduction <add>, %14, %cst_12 [0] : vector<256x256xf32> to vector<256xf32>
    %16 = vector.shape_cast %15 : vector<256xf32> to vector<1x256xf32>
    %17 = tpu.reciprocal %16 {approx = true} : vector<1x256xf32> -> vector<1x256xf32>
    %18 = arith.mulf %16, %17 : vector<1x256xf32>
    %cst_13 = arith.constant 2.000000e+00 : f32
    %19 = vector.broadcast %cst_13 : f32 to vector<1x256xf32>
    %20 = arith.subf %19, %18 : vector<1x256xf32>
    %21 = arith.mulf %17, %20 : vector<1x256xf32>
    %c0_14 = arith.constant 0 : index
    %c0_15 = arith.constant 0 : index
    %c0_16 = arith.constant 0 : index
    %22 = vector.load %arg4[%c0_14, %c0_15, %c0_16] : memref<2x256x256xf32, #tpu.memory_space<vmem>>, vector<1x256x256xf32>
    %23 = vector.shape_cast %22 : vector<1x256x256xf32> to vector<256x256xf32>
    %24 = vector.broadcast %21 : vector<1x256xf32> to vector<256x256xf32>
    %25 = arith.mulf %23, %24 : vector<256x256xf32>
    %c0_17 = arith.constant 0 : index
    %c0_18 = arith.constant 0 : index
    %c0_19 = arith.constant 0 : index
    %26 = vector.load %arg4[%c0_17, %c0_18, %c0_19] : memref<2x256x256xf32, #tpu.memory_space<vmem>>, vector<1x256x256xf32>
    %27 = vector.shape_cast %26 : vector<1x256x256xf32> to vector<256x256xf32>
    %28 = vector.shape_cast %25 : vector<256x256xf32> to vector<1x256x256xf32>
    tpu.vector_store %arg4[%c0_17, %c0_18, %c0_19], %28 {strides = array<i32>} : memref<2x256x256xf32, #tpu.memory_space<vmem>>, vector<1x256x256xf32>,
    %c1 = arith.constant 1 : index
    %c0_20 = arith.constant 0 : index
    %c0_21 = arith.constant 0 : index
    %29 = vector.load %arg2[%c1, %c0_20, %c0_21] : memref<2x8x256xf32, #tpu.memory_space<vmem>>, vector<1x8x256xf32>
    %30 = vector.shape_cast %29 : vector<1x8x256xf32> to vector<8x256xf32>
    %c1_22 = arith.constant 1 : index
    %c0_23 = arith.constant 0 : index
    %c0_24 = arith.constant 0 : index
    %31 = vector.load %arg3[%c1_22, %c0_23, %c0_24] : memref<2x8x256xf32, #tpu.memory_space<vmem>>, vector<1x8x256xf32>
    %32 = vector.shape_cast %31 : vector<1x8x256xf32> to vector<8x256xf32>
    %cst_25 = arith.constant dense<0.000000e+00> : vector<256x256xf32>
    %33 = tpu.matmul %30, %32, %cst_25 {dimension_numbers = #tpu.dot_dimension_numbers<[0], [0], [1], [1], [0, 1, 1, 1], [], []>} : vector<8x256xf32>, vector<8x256xf32>, vector<256x256xf32> -> vector<256x256xf32>
    %cst_26 = arith.constant dense<0xFF800000> : vector<256xf32>
    %34 = vector.multi_reduction <maximumf>, %33, %cst_26 [0] : vector<256x256xf32> to vector<256xf32>
    %35 = vector.shape_cast %34 : vector<256xf32> to vector<1x256xf32>
    %36 = vector.broadcast %35 : vector<1x256xf32> to vector<256x256xf32>
    %37 = arith.subf %33, %36 : vector<256x256xf32>
    %38 = math.exp %37 : vector<256x256xf32>
    %c1_27 = arith.constant 1 : index
    %c0_28 = arith.constant 0 : index
    %c0_29 = arith.constant 0 : index
    %39 = vector.load %arg4[%c1_27, %c0_28, %c0_29] : memref<2x256x256xf32, #tpu.memory_space<vmem>>, vector<1x256x256xf32>
    %40 = vector.shape_cast %39 : vector<1x256x256xf32> to vector<256x256xf32>
    %41 = vector.shape_cast %38 : vector<256x256xf32> to vector<1x256x256xf32>
    tpu.vector_store %arg4[%c1_27, %c0_28, %c0_29], %41 {strides = array<i32>} : memref<2x256x256xf32, #tpu.memory_space<vmem>>, vector<1x256x256xf32>,
    %c1_30 = arith.constant 1 : index
    %c0_31 = arith.constant 0 : index
    %c0_32 = arith.constant 0 : index
    %42 = vector.load %arg4[%c1_30, %c0_31, %c0_32] : memref<2x256x256xf32, #tpu.memory_space<vmem>>, vector<1x256x256xf32>
    %43 = vector.shape_cast %42 : vector<1x256x256xf32> to vector<256x256xf32>
    %cst_33 = arith.constant dense<0.000000e+00> : vector<256xf32>
    %44 = vector.multi_reduction <add>, %43, %cst_33 [0] : vector<256x256xf32> to vector<256xf32>
    %45 = vector.shape_cast %44 : vector<256xf32> to vector<1x256xf32>
    %46 = tpu.reciprocal %45 {approx = true} : vector<1x256xf32> -> vector<1x256xf32>
    %47 = arith.mulf %45, %46 : vector<1x256xf32>
    %cst_34 = arith.constant 2.000000e+00 : f32
    %48 = vector.broadcast %cst_34 : f32 to vector<1x256xf32>
    %49 = arith.subf %48, %47 : vector<1x256xf32>
    %50 = arith.mulf %46, %49 : vector<1x256xf32>
    %c1_35 = arith.constant 1 : index
    %c0_36 = arith.constant 0 : index
    %c0_37 = arith.constant 0 : index
    %51 = vector.load %arg4[%c1_35, %c0_36, %c0_37] : memref<2x256x256xf32, #tpu.memory_space<vmem>>, vector<1x256x256xf32>
    %52 = vector.shape_cast %51 : vector<1x256x256xf32> to vector<256x256xf32>
    %53 = vector.broadcast %50 : vector<1x256xf32> to vector<256x256xf32>
    %54 = arith.mulf %52, %53 : vector<256x256xf32>
    %c1_38 = arith.constant 1 : index
    %c0_39 = arith.constant 0 : index
    %c0_40 = arith.constant 0 : index
    %55 = vector.load %arg4[%c1_38, %c0_39, %c0_40] : memref<2x256x256xf32, #tpu.memory_space<vmem>>, vector<1x256x256xf32>
    %56 = vector.shape_cast %55 : vector<1x256x256xf32> to vector<256x256xf32>
    %57 = vector.shape_cast %54 : vector<256x256xf32> to vector<1x256x256xf32>
    tpu.vector_store %arg4[%c1_38, %c0_39, %c0_40], %57 {strides = array<i32>} : memref<2x256x256xf32, #tpu.memory_space<vmem>>, vector<1x256x256xf32>,
    return
  }
  func.func @transform_0(%arg0: i32, %arg1: i32) -> (i32, i32, i32) {
    %c0_i32 = arith.constant 0 : i32
    %c0_i32_0 = arith.constant 0 : i32
    %c0_i32_1 = arith.constant 0 : i32
    return %arg0, %c0_i32, %c0_i32_0 : i32, i32, i32
  }
  func.func @transform_1(%arg0: i32, %arg1: i32) -> (i32, i32, i32) {
    %c0_i32 = arith.constant 0 : i32
    %c0_i32_0 = arith.constant 0 : i32
    return %arg0, %c0_i32, %arg1 : i32, i32, i32
  }
  func.func @transform_2(%arg0: i32, %arg1: i32) -> (i32, i32, i32) {
    %c0_i32 = arith.constant 0 : i32
    %c0_i32_0 = arith.constant 0 : i32
    return %arg0, %c0_i32, %arg1 : i32, i32, i32
  }
}

</mosaic_0001>

<llo_original>
// kernel: tpu_custom_call.1
$region0: #{tpu_custom_call.1}
  #allocation0 [shape = 'u32[]', space=smem, size = 0x4, offset = 0x4, fixed_abs, tag = 'smem constant byte address 0x4 - core index']
  #allocation1 [shape = 'u32[144,128]{1,0:T(1,128)}', space=vmem, size = 0x12000, scoped, tag = 'internal scratch']
  %s0 = inlined_call_operand.hbm [shape: f32[2,8,256], index: 0, kind: input, shape index: {}]
  %s1 = inlined_call_operand.hbm [shape: f32[2,8,256], index: 1, kind: input, shape index: {}]
  %s2 = inlined_call_operand.hbm [shape: f32[2,256,256], index: 2, kind: output, shape index: {}]
  %s3 = sld [smem:[#allocation0]]
  $region26: #{tpu_custom_call.1} parent=0
    _
  %s5 = ssub.s32 1, %s3
  %s6 = scalar_select 0, %s5, %s3
  $region1: #{tpu_custom_call.1} parent=0
    #allocation2 [shape = 'u8[16384]{0}', space=vmem, size = 0x4000, scoped, tag = 'input window, operand 0, single buffered']
    #allocation3 [shape = 's32[1]{0}', space=sflag, size = 0x4, scoped, tag = 'scoped memory for tpu_custom_call.1']
    #allocation4 [shape = 's32[1]{0}', space=sflag, size = 0x4, scoped, tag = 'scoped memory for tpu_custom_call.1']
    #allocation5 [shape = 'u8[16384]{0}', space=vmem, size = 0x4000, scoped, tag = 'input window, operand 1, single buffered']
    #allocation6 [shape = 's32[1]{0}', space=sflag, size = 0x4, scoped, tag = 'scoped memory for tpu_custom_call.1']
    #allocation7 [shape = 'u8[524288]{0}', space=vmem, size = 0x80000, scoped, tag = 'output window, operand 0, single buffered']
    %7 = vsyncpa [#allocation3], 0
    %8 = vsyncpa [#allocation6], 0
    %9 = vsyncpa [#allocation4], 0
    // Predicated region
    $region2: #{tpu_custom_call.1} parent=1 // pred_check
      _
    $region3: #{tpu_custom_call.1} parent=1 // pred_check_branch
      %11 = sbr.rel (0) target = $region5
    $region4: #{tpu_custom_call.1} parent=1 // pred_region
      %s13 = ssub.s32 512, 512
      %14 = vsyncadd [#allocation3], %s13
      %s15 = sshll.u32 [#allocation2], 4
      %s16 = int_to_ptr.vmem [resolvable:$true] %s15
      %21 = dma.hbm_to_vmem [thread:$0]  %s0, 512, %s16, [#allocation3], 256, 256, 16
    $region5: #{tpu_custom_call.1} parent=1 // pred_fallthru
      _
    // Predicated region
    $region6: #{tpu_custom_call.1} parent=1 // pred_check
      _
    $region7: #{tpu_custom_call.1} parent=1 // pred_check_branch
      %23 = sbr.rel (0) target = $region9
    $region8: #{tpu_custom_call.1} parent=1 // pred_region
      %s25 = ssub.s32 512, 512
      %26 = vsyncadd [#allocation6], %s25
      %s27 = sshll.u32 [#allocation5], 4
      %s28 = int_to_ptr.vmem [resolvable:$true] %s27
      %33 = dma.hbm_to_vmem [thread:$0]  %s1, 512, %s28, [#allocation6], 256, 256, 16
    $region9: #{tpu_custom_call.1} parent=1 // pred_fallthru
      _
    // Predicated region
    $region10: #{tpu_custom_call.1} parent=1 // pred_check
      _
    $region11: #{tpu_custom_call.1} parent=1 // pred_check_branch
      %35 = sbr.rel (0) target = $region13
    $region12: #{tpu_custom_call.1} parent=1 // pred_region
      %36 = dma.done [#allocation3], 512
    $region13: #{tpu_custom_call.1} parent=1 // pred_fallthru
      _
    // Predicated region
    $region14: #{tpu_custom_call.1} parent=1 // pred_check
      _
    $region15: #{tpu_custom_call.1} parent=1 // pred_check_branch
      %38 = sbr.rel (0) target = $region17
    $region16: #{tpu_custom_call.1} parent=1 // pred_region
      %39 = dma.done [#allocation6], 512
    $region17: #{tpu_custom_call.1} parent=1 // pred_fallthru
      _
    %v40 = vld [vmem:[#allocation2] sm:$0xff]
    %v41 = vld [vmem:[#allocation2 + $0x8] sm:$0xff]
    %v42 = vld [vmem:[#allocation5] sm:$0xff]
    %v43 = vld [vmem:[#allocation5 + $0x8] sm:$0xff]
    %44 = vxpose.xlu0.b32.start [1/16] %v40, 128
    %45 = vxpose.xlu0.b32.cont [2/16] 0.0, 128
    %46 = vxpose.xlu0.b32.cont [3/16] 0.0, 128
    %47 = vxpose.xlu0.b32.cont [4/16] 0.0, 128
    %48 = vxpose.xlu0.b32.cont [5/16] 0.0, 128
    %49 = vxpose.xlu0.b32.cont [6/16] 0.0, 128
    %50 = vxpose.xlu0.b32.cont [7/16] 0.0, 128
    %51 = vxpose.xlu0.b32.cont [8/16] 0.0, 128
    %52 = vxpose.xlu0.b32.cont [9/16] 0.0, 128
    %53 = vxpose.xlu0.b32.cont [10/16] 0.0, 128
    %54 = vxpose.xlu0.b32.cont [11/16] 0.0, 128
    %55 = vxpose.xlu0.b32.cont [12/16] 0.0, 128
    %56 = vxpose.xlu0.b32.cont [13/16] 0.0, 128
    %57 = vxpose.xlu0.b32.cont [14/16] 0.0, 128
    %58 = vxpose.xlu0.b32.cont [15/16] 0.0, 128
    %59 = vxpose.xlu0.b32.end [16/16] 0.0, 128
    %v60 = vpop.trf.xlu0
    %v61 = vpop.trf.xlu0
    %v62 = vpop.trf.xlu0
    %v63 = vpop.trf.xlu0
    %v64 = vpop.trf.xlu0
    %v65 = vpop.trf.xlu0
    %v66 = vpop.trf.xlu0
    %v67 = vpop.trf.xlu0
    %v68 = vpop.trf.xlu0
    %v69 = vpop.trf.xlu0
    %v70 = vpop.trf.xlu0
    %v71 = vpop.trf.xlu0
    %v72 = vpop.trf.xlu0
    %v73 = vpop.trf.xlu0
    %v74 = vpop.trf.xlu0
    %v75 = vpop.trf.xlu0
    %76 = vxpose.xlu0.b32.start [1/16] %v41, 128
    %77 = vxpose.xlu0.b32.cont [2/16] 0.0, 128
    %78 = vxpose.xlu0.b32.cont [3/16] 0.0, 128
    %79 = vxpose.xlu0.b32.cont [4/16] 0.0, 128
    %80 = vxpose.xlu0.b32.cont [5/16] 0.0, 128
    %81 = vxpose.xlu0.b32.cont [6/16] 0.0, 128
    %82 = vxpose.xlu0.b32.cont [7/16] 0.0, 128
    %83 = vxpose.xlu0.b32.cont [8/16] 0.0, 128
    %84 = vxpose.xlu0.b32.cont [9/16] 0.0, 128
    %85 = vxpose.xlu0.b32.cont [10/16] 0.0, 128
    %86 = vxpose.xlu0.b32.cont [11/16] 0.0, 128
    %87 = vxpose.xlu0.b32.cont [12/16] 0.0, 128
    %88 = vxpose.xlu0.b32.cont [13/16] 0.0, 128
    %89 = vxpose.xlu0.b32.cont [14/16] 0.0, 128
    %90 = vxpose.xlu0.b32.cont [15/16] 0.0, 128
    %91 = vxpose.xlu0.b32.end [16/16] 0.0, 128
    %v92 = vpop.trf.xlu0
    %v93 = vpop.trf.xlu0
    %v94 = vpop.trf.xlu0
    %v95 = vpop.trf.xlu0
    %v96 = vpop.trf.xlu0
    %v97 = vpop.trf.xlu0
    %v98 = vpop.trf.xlu0
    %v99 = vpop.trf.xlu0
    %v100 = vpop.trf.xlu0
    %v101 = vpop.trf.xlu0
    %v102 = vpop.trf.xlu0
    %v103 = vpop.trf.xlu0
    %v104 = vpop.trf.xlu0
    %v105 = vpop.trf.xlu0
    %v106 = vpop.trf.xlu0
    %v107 = vpop.trf.xlu0
    %vm108 = vcmask 64512
    %v110 = vsel %vm108, %v60, 0
    %v113 = vsel %vm108, %v61, 0
    %v116 = vsel %vm108, %v62, 0
    %v119 = vsel %vm108, %v63, 0
    %v122 = vsel %vm108, %v64, 0
    %v125 = vsel %vm108, %v65, 0
    %v128 = vsel %vm108, %v66, 0
    %v131 = vsel %vm108, %v67, 0
    %v134 = vsel %vm108, %v68, 0
    %v137 = vsel %vm108, %v69, 0
    %v140 = vsel %vm108, %v70, 0
    %v143 = vsel %vm108, %v71, 0
    %v146 = vsel %vm108, %v72, 0
    %v149 = vsel %vm108, %v73, 0
    %v152 = vsel %vm108, %v74, 0
    %v155 = vsel %vm108, %v75, 0
    %v158 = vsel %vm108, %v92, 0
    %v161 = vsel %vm108, %v93, 0
    %v164 = vsel %vm108, %v94, 0
    %v167 = vsel %vm108, %v95, 0
    %v170 = vsel %vm108, %v96, 0
    %v173 = vsel %vm108, %v97, 0
    %v176 = vsel %vm108, %v98, 0
    %v179 = vsel %vm108, %v99, 0
    %v182 = vsel %vm108, %v100, 0
    %v185 = vsel %vm108, %v101, 0
    %v188 = vsel %vm108, %v102, 0
    %v191 = vsel %vm108, %v103, 0
    %v194 = vsel %vm108, %v104, 0
    %v197 = vsel %vm108, %v105, 0
    %v200 = vsel %vm108, %v106, 0
    %v203 = vsel %vm108, %v107, 0
    %205 = vmatprep.subr.mxu0 %v43
    %206 = vmatpush1.msra.mxu0 %v42
    %207 = vmatprep.subr.mxu0 0.0
    %208 = vmatpush1.msra.mxu0 0.0
    %209 = vmatprep.subr.mxu0 0.0
    %210 = vmatpush1.msra.mxu0 0.0
    %211 = vmatprep.subr.mxu0 0.0
    %212 = vmatpush1.msra.mxu0 0.0
    %213 = vmatprep.subr.mxu0 0.0
    %214 = vmatpush1.msra.mxu0 0.0
    %215 = vmatprep.subr.mxu0 0.0
    %216 = vmatpush1.msra.mxu0 0.0
    %217 = vmatprep.subr.mxu0 0.0
    %218 = vmatpush1.msra.mxu0 0.0
    %219 = vmatprep.subr.mxu0 0.0
    %220 = vmatpush1.msra.mxu0 0.0
    %221 = vmatprep.subr.mxu0 0.0
    %222 = vmatpush1.msra.mxu0 0.0
    %223 = vmatprep.subr.mxu0 0.0
    %224 = vmatpush1.msra.mxu0 0.0
    %225 = vmatprep.subr.mxu0 0.0
    %226 = vmatpush1.msra.mxu0 0.0
    %227 = vmatprep.subr.mxu0 0.0
    %228 = vmatpush1.msra.mxu0 0.0
    %229 = vmatprep.subr.mxu0 0.0
    %230 = vmatpush1.msra.mxu0 0.0
    %231 = vmatprep.subr.mxu0 0.0
    %232 = vmatpush1.msra.mxu0 0.0
    %233 = vmatprep.subr.mxu0 0.0
    %234 = vmatpush1.msra.mxu0 0.0
    %235 = vmatprep.subr.mxu0 0.0
    %236 = vmatpush1.msra.mxu0 0.0
    %237 = vmatprep.subr.mxu0 0.0
    %238 = vmatpush1.msra.mxu0 0.0
    %239 = vmatprep.subr.mxu0 0.0
    %240 = vmatpush1.msra.mxu0 0.0
    %241 = vmatprep.subr.mxu0 0.0
    %242 = vmatpush1.msra.mxu0 0.0
    %243 = vmatprep.subr.mxu0 0.0
    %244 = vmatpush1.msra.mxu0 0.0
    %245 = vmatprep.subr.mxu0 0.0
    %246 = vmatpush1.msra.mxu0 0.0
    %247 = vmatprep.subr.mxu0 0.0
    %248 = vmatpush1.msra.mxu0 0.0
    %249 = vmatprep.subr.mxu0 0.0
    %250 = vmatpush1.msra.mxu0 0.0
    %251 = vmatprep.subr.mxu0 0.0
    %252 = vmatpush1.msra.mxu0 0.0
    %253 = vmatprep.subr.mxu0 0.0
    %254 = vmatpush1.msra.mxu0 0.0
    %255 = vmatprep.subr.mxu0 0.0
    %256 = vmatpush1.msra.mxu0 0.0
    %257 = vmatprep.subr.mxu0 0.0
    %258 = vmatpush1.msra.mxu0 0.0
    %259 = vmatprep.subr.mxu0 0.0
    %260 = vmatpush1.msra.mxu0 0.0
    %261 = vmatprep.subr.mxu0 0.0
    %262 = vmatpush1.msra.mxu0 0.0
    %263 = vmatprep.subr.mxu0 0.0
    %264 = vmatpush1.msra.mxu0 0.0
    %265 = vmatprep.subr.mxu0 0.0
    %266 = vmatpush1.msra.mxu0 0.0
    %267 = vmatprep.subr.mxu0 0.0
    %268 = vmatpush1.msra.mxu0 0.0
    %269 = vmatprep.mubr.f32.mxu0 0.0
    %270 = vmatmul.mubr.f32.gmra.mrb[0].mxu0 %v110
    %v271 = vpop.f32.mrb[0].mxu0
    %v272 = vadd.f32 0.0, %v271
    %v273 = vpop.f32.mrb[0].mxu0
    %v274 = vadd.f32 0.0, %v273
    %275 = vmatprep.mubr.f32.mxu0 0.0
    %276 = vmatmul.mubr.f32.gmra.mrb[0].mxu0 %v113
    %v277 = vpop.f32.mrb[0].mxu0
    %v278 = vadd.f32 0.0, %v277
    %v279 = vpop.f32.mrb[0].mxu0
    %v280 = vadd.f32 0.0, %v279
    %281 = vmatprep.mubr.f32.mxu0 0.0
    %282 = vmatmul.mubr.f32.gmra.mrb[0].mxu0 %v116
    %v283 = vpop.f32.mrb[0].mxu0
    %v284 = vadd.f32 0.0, %v283
    %v285 = vpop.f32.mrb[0].mxu0
    %v286 = vadd.f32 0.0, %v285
    %287 = vmatprep.mubr.f32.mxu0 0.0
    %288 = vmatmul.mubr.f32.gmra.mrb[0].mxu0 %v119
    %v289 = vpop.f32.mrb[0].mxu0
    %v290 = vadd.f32 0.0, %v289
    %v291 = vpop.f32.mrb[0].mxu0
    %v292 = vadd.f32 0.0, %v291
    %293 = vmatprep.mubr.f32.mxu0 0.0
    %294 = vmatmul.mubr.f32.gmra.mrb[0].mxu0 %v122
    %v295 = vpop.f32.mrb[0].mxu0
    %v296 = vadd.f32 0.0, %v295
    %v297 = vpop.f32.mrb[0].mxu0
    %v298 = vadd.f32 0.0, %v297
    %299 = vmatprep.mubr.f32.mxu0 0.0
    %300 = vmatmul.mubr.f32.gmra.mrb[0].mxu0 %v125
    %v301 = vpop.f32.mrb[0].mxu0
    %v302 = vadd.f32 0.0, %v301
    %v303 = vpop.f32.mrb[0].mxu0
    %v304 = vadd.f32 0.0, %v303
    %305 = vmatprep.mubr.f32.mxu0 0.0
    %306 = vmatmul.mubr.f32.gmra.mrb[0].mxu0 %v128
    %v307 = vpop.f32.mrb[0].mxu0
    %v308 = vadd.f32 0.0, %v307
    %v309 = vpop.f32.mrb[0].mxu0
    %v310 = vadd.f32 0.0, %v309
    %311 = vmatprep.mubr.f32.mxu0 0.0
    %312 = vmatmul.mubr.f32.gmra.mrb[0].mxu0 %v131
    %v313 = vpop.f32.mrb[0].mxu0
    %v314 = vadd.f32 0.0, %v313
    %v315 = vpop.f32.mrb[0].mxu0
    %v316 = vadd.f32 0.0, %v315
    %317 = vmatprep.mubr.f32.mxu0 0.0
    %318 = vmatmul.mubr.f32.gmra.mrb[0].mxu0 %v134
    %v319 = vpop.f32.mrb[0].mxu0
    %v320 = vadd.f32 0.0, %v319
    %v321 = vpop.f32.mrb[0].mxu0
    %v322 = vadd.f32 0.0, %v321
    %323 = vmatprep.mubr.f32.mxu0 0.0
    %324 = vmatmul.mubr.f32.gmra.mrb[0].mxu0 %v137
    %v325 = vpop.f32.mrb[0].mxu0
    %v326 = vadd.f32 0.0, %v325
    %v327 = vpop.f32.mrb[0].mxu0
    %v328 = vadd.f32 0.0, %v327
    %329 = vmatprep.mubr.f32.mxu0 0.0
    %330 = vmatmul.mubr.f32.gmra.mrb[0].mxu0 %v140
    %v331 = vpop.f32.mrb[0].mxu0
    %v332 = vadd.f32 0.0, %v331
    %v333 = vpop.f32.mrb[0].mxu0
    %v334 = vadd.f32 0.0, %v333
    %335 = vmatprep.mubr.f32.mxu0 0.0
    %336 = vmatmul.mubr.f32.gmra.mrb[0].mxu0 %v143
    %v337 = vpop.f32.mrb[0].mxu0
    %v338 = vadd.f32 0.0, %v337
    %v339 = vpop.f32.mrb[0].mxu0
    %v340 = vadd.f32 0.0, %v339
    %341 = vmatprep.mubr.f32.mxu0 0.0
    %342 = vmatmul.mubr.f32.gmra.mrb[0].mxu0 %v146
    %v343 = vpop.f32.mrb[0].mxu0
    %v344 = vadd.f32 0.0, %v343
    %v345 = vpop.f32.mrb[0].mxu0
    %v346 = vadd.f32 0.0, %v345
    %347 = vmatprep.mubr.f32.mxu0 0.0
    %348 = vmatmul.mubr.f32.gmra.mrb[0].mxu0 %v149
    %v349 = vpop.f32.mrb[0].mxu0
    %v350 = vadd.f32 0.0, %v349
    %v351 = vpop.f32.mrb[0].mxu0
    %v352 = vadd.f32 0.0, %v351
    %353 = vmatprep.mubr.f32.mxu0 0.0
    %354 = vmatmul.mubr.f32.gmra.mrb[0].mxu0 %v152
    %v355 = vpop.f32.mrb[0].mxu0
    %v356 = vadd.f32 0.0, %v355
    %v357 = vpop.f32.mrb[0].mxu0
    %v358 = vadd.f32 0.0, %v357
    %359 = vmatprep.mubr.f32.mxu0 0.0
    %360 = vmatmul.mubr.f32.gmra.mrb[0].mxu0 %v155
    %v361 = vpop.f32.mrb[0].mxu0
    %v362 = vadd.f32 0.0, %v361
    %v363 = vpop.f32.mrb[0].mxu0
    %v364 = vadd.f32 0.0, %v363
    %365 = vmatprep.mubr.f32.mxu0 0.0
    %366 = vmatmul.mubr.f32.gmra.mrb[0].mxu0 %v158
    %v367 = vpop.f32.mrb[0].mxu0
    %v368 = vadd.f32 0.0, %v367
    %v369 = vpop.f32.mrb[0].mxu0
    %v370 = vadd.f32 0.0, %v369
    %371 = vmatprep.mubr.f32.mxu0 0.0
    %372 = vmatmul.mubr.f32.gmra.mrb[0].mxu0 %v161
    %v373 = vpop.f32.mrb[0].mxu0
    %v374 = vadd.f32 0.0, %v373
    %v375 = vpop.f32.mrb[0].mxu0
    %v376 = vadd.f32 0.0, %v375
    %377 = vmatprep.mubr.f32.mxu0 0.0
    %378 = vmatmul.mubr.f32.gmra.mrb[0].mxu0 %v164
    %v379 = vpop.f32.mrb[0].mxu0
    %v380 = vadd.f32 0.0, %v379
    %v381 = vpop.f32.mrb[0].mxu0
    %v382 = vadd.f32 0.0, %v381
    %383 = vmatprep.mubr.f32.mxu0 0.0
    %384 = vmatmul.mubr.f32.gmra.mrb[0].mxu0 %v167
    %v385 = vpop.f32.mrb[0].mxu0
    %v386 = vadd.f32 0.0, %v385
    %v387 = vpop.f32.mrb[0].mxu0
    %v388 = vadd.f32 0.0, %v387
    %389 = vmatprep.mubr.f32.mxu0 0.0
    %390 = vmatmul.mubr.f32.gmra.mrb[0].mxu0 %v170
    %v391 = vpop.f32.mrb[0].mxu0
    %v392 = vadd.f32 0.0, %v391
    %v393 = vpop.f32.mrb[0].mxu0
    %v394 = vadd.f32 0.0, %v393
    %395 = vmatprep.mubr.f32.mxu0 0.0
    %396 = vmatmul.mubr.f32.gmra.mrb[0].mxu0 %v173
    %v397 = vpop.f32.mrb[0].mxu0
    %v398 = vadd.f32 0.0, %v397
    %v399 = vpop.f32.mrb[0].mxu0
    %v400 = vadd.f32 0.0, %v399
    %401 = vmatprep.mubr.f32.mxu0 0.0
    %402 = vmatmul.mubr.f32.gmra.mrb[0].mxu0 %v176
    %v403 = vpop.f32.mrb[0].mxu0
    %v404 = vadd.f32 0.0, %v403
    %v405 = vpop.f32.mrb[0].mxu0
    %v406 = vadd.f32 0.0, %v405
    %407 = vmatprep.mubr.f32.mxu0 0.0
    %408 = vmatmul.mubr.f32.gmra.mrb[0].mxu0 %v179
    %v409 = vpop.f32.mrb[0].mxu0
    %v410 = vadd.f32 0.0, %v409
    %v411 = vpop.f32.mrb[0].mxu0
    %v412 = vadd.f32 0.0, %v411
    %413 = vmatprep.mubr.f32.mxu0 0.0
    %414 = vmatmul.mubr.f32.gmra.mrb[0].mxu0 %v182
    %v415 = vpop.f32.mrb[0].mxu0
    %v416 = vadd.f32 0.0, %v415
    %v417 = vpop.f32.mrb[0].mxu0
    %v418 = vadd.f32 0.0, %v417
    %419 = vmatprep.mubr.f32.mxu0 0.0
    %420 = vmatmul.mubr.f32.gmra.mrb[0].mxu0 %v185
    %v421 = vpop.f32.mrb[0].mxu0
    %v422 = vadd.f32 0.0, %v421
    %v423 = vpop.f32.mrb[0].mxu0
    %v424 = vadd.f32 0.0, %v423
    %425 = vmatprep.mubr.f32.mxu0 0.0
    %426 = vmatmul.mubr.f32.gmra.mrb[0].mxu0 %v188
    %v427 = vpop.f32.mrb[0].mxu0
    %v428 = vadd.f32 0.0, %v427
    %v429 = vpop.f32.mrb[0].mxu0
    %v430 = vadd.f32 0.0, %v429
    %431 = vmatprep.mubr.f32.mxu0 0.0
    %432 = vmatmul.mubr.f32.gmra.mrb[0].mxu0 %v191
    %v433 = vpop.f32.mrb[0].mxu0
    %v434 = vadd.f32 0.0, %v433
    %v435 = vpop.f32.mrb[0].mxu0
    %v436 = vadd.f32 0.0, %v435
    %437 = vmatprep.mubr.f32.mxu0 0.0
    %438 = vmatmul.mubr.f32.gmra.mrb[0].mxu0 %v194
    %v439 = vpop.f32.mrb[0].mxu0
    %v440 = vadd.f32 0.0, %v439
    %v441 = vpop.f32.mrb[0].mxu0
    %v442 = vadd.f32 0.0, %v441
    %443 = vmatprep.mubr.f32.mxu0 0.0
    %444 = vmatmul.mubr.f32.gmra.mrb[0].mxu0 %v197
    %v445 = vpop.f32.mrb[0].mxu0
    %v446 = vadd.f32 0.0, %v445
    %v447 = vpop.f32.mrb[0].mxu0
    %v448 = vadd.f32 0.0, %v447
    %449 = vmatprep.mubr.f32.mxu0 0.0
    %450 = vmatmul.mubr.f32.gmra.mrb[0].mxu0 %v200
    %v451 = vpop.f32.mrb[0].mxu0
    %v452 = vadd.f32 0.0, %v451
    %v453 = vpop.f32.mrb[0].mxu0
    %v454 = vadd.f32 0.0, %v453
    %455 = vmatprep.mubr.f32.mxu0 0.0
    %456 = vmatmul.mubr.f32.gmra.mrb[0].mxu0 %v203
    %v457 = vpop.f32.mrb[0].mxu0
    %v458 = vadd.f32 0.0, %v457
    %v459 = vpop.f32.mrb[0].mxu0
    %v460 = vadd.f32 0.0, %v459
    %461 = vdwg.mxu0
    %v462 = vmax.f32 %v272, %v284
    %v463 = vmax.f32 %v278, %v290
    %v464 = vmax.f32 %v462, %v296
    %v465 = vmax.f32 %v463, %v302
    %v466 = vmax.f32 %v464, %v308
    %v467 = vmax.f32 %v465, %v314
    %v468 = vmax.f32 %v466, %v320
    %v469 = vmax.f32 %v467, %v326
    %v470 = vmax.f32 %v468, %v332
    %v471 = vmax.f32 %v469, %v338
    %v472 = vmax.f32 %v470, %v344
    %v473 = vmax.f32 %v471, %v350
    %v474 = vmax.f32 %v472, %v356
    %v475 = vmax.f32 %v473, %v362
    %v476 = vmax.f32 %v474, %v368
    %v477 = vmax.f32 %v475, %v374
    %v478 = vmax.f32 %v476, %v380
    %v479 = vmax.f32 %v477, %v386
    %v480 = vmax.f32 %v478, %v392
    %v481 = vmax.f32 %v479, %v398
    %v482 = vmax.f32 %v480, %v404
    %v483 = vmax.f32 %v481, %v410
    %v484 = vmax.f32 %v482, %v416
    %v485 = vmax.f32 %v483, %v422
    %v486 = vmax.f32 %v484, %v428
    %v487 = vmax.f32 %v485, %v434
    %v488 = vmax.f32 %v486, %v440
    %v489 = vmax.f32 %v487, %v446
    %v490 = vmax.f32 %v488, %v452
    %v491 = vmax.f32 %v489, %v458
    %v492 = vmax.f32 %v490, %v491
    %v493 = vrot.slane %v492, 4
    %v494 = vmax.f32 %v492, %v493
    %v495 = vrot.slane %v494, 2
    %v496 = vmax.f32 %v494, %v495
    %v497 = vrot.slane %v496, 1
    %v498 = vmax.f32 %v496, %v497
    %v499 = vmax.f32 %v274, %v286
    %v500 = vmax.f32 %v280, %v292
    %v501 = vmax.f32 %v499, %v298
    %v502 = vmax.f32 %v500, %v304
    %v503 = vmax.f32 %v501, %v310
    %v504 = vmax.f32 %v502, %v316
    %v505 = vmax.f32 %v503, %v322
    %v506 = vmax.f32 %v504, %v328
    %v507 = vmax.f32 %v505, %v334
    %v508 = vmax.f32 %v506, %v340
    %v509 = vmax.f32 %v507, %v346
    %v510 = vmax.f32 %v508, %v352
    %v511 = vmax.f32 %v509, %v358
    %v512 = vmax.f32 %v510, %v364
    %v513 = vmax.f32 %v511, %v370
    %v514 = vmax.f32 %v512, %v376
    %v515 = vmax.f32 %v513, %v382
    %v516 = vmax.f32 %v514, %v388
    %v517 = vmax.f32 %v515, %v394
    %v518 = vmax.f32 %v516, %v400
    %v519 = vmax.f32 %v517, %v406
    %v520 = vmax.f32 %v518, %v412
    %v521 = vmax.f32 %v519, %v418
    %v522 = vmax.f32 %v520, %v424
    %v523 = vmax.f32 %v521, %v430
    %v524 = vmax.f32 %v522, %v436
    %v525 = vmax.f32 %v523, %v442
    %v526 = vmax.f32 %v524, %v448
    %v527 = vmax.f32 %v525, %v454
    %v528 = vmax.f32 %v526, %v460
    %v529 = vmax.f32 %v527, %v528
    %v530 = vrot.slane %v529, 4
    %v531 = vmax.f32 %v529, %v530
    %v532 = vrot.slane %v531, 2
    %v533 = vmax.f32 %v531, %v532
    %v534 = vrot.slane %v533, 1
    %v535 = vmax.f32 %v533, %v534
    %v536 = vsub.f32 %v272, %v498
    %v537 = vsub.f32 %v274, %v535
    %v538 = vsub.f32 %v278, %v498
    %v539 = vsub.f32 %v280, %v535
    %v540 = vsub.f32 %v284, %v498
    %v541 = vsub.f32 %v286, %v535
    %v542 = vsub.f32 %v290, %v498
    %v543 = vsub.f32 %v292, %v535
    %v544 = vsub.f32 %v296, %v498
    %v545 = vsub.f32 %v298, %v535
    %v546 = vsub.f32 %v302, %v498
    %v547 = vsub.f32 %v304, %v535
    %v548 = vsub.f32 %v308, %v498
    %v549 = vsub.f32 %v310, %v535
    %v550 = vsub.f32 %v314, %v498
    %v551 = vsub.f32 %v316, %v535
    %v552 = vsub.f32 %v320, %v498
    %v553 = vsub.f32 %v322, %v535
    %v554 = vsub.f32 %v326, %v498
    %v555 = vsub.f32 %v328, %v535
    %v556 = vsub.f32 %v332, %v498
    %v557 = vsub.f32 %v334, %v535
    %v558 = vsub.f32 %v338, %v498
    %v559 = vsub.f32 %v340, %v535
    %v560 = vsub.f32 %v344, %v498
    %v561 = vsub.f32 %v346, %v535
    %v562 = vsub.f32 %v350, %v498
    %v563 = vsub.f32 %v352, %v535
    %v564 = vsub.f32 %v356, %v498
    %v565 = vsub.f32 %v358, %v535
    %v566 = vsub.f32 %v362, %v498
    %v567 = vsub.f32 %v364, %v535
    %v568 = vsub.f32 %v368, %v498
    %v569 = vsub.f32 %v370, %v535
    %v570 = vsub.f32 %v374, %v498
    %v571 = vsub.f32 %v376, %v535
    %v572 = vsub.f32 %v380, %v498
    %v573 = vsub.f32 %v382, %v535
    %v574 = vsub.f32 %v386, %v498
    %v575 = vsub.f32 %v388, %v535
    %v576 = vsub.f32 %v392, %v498
    %v577 = vsub.f32 %v394, %v535
    %v578 = vsub.f32 %v398, %v498
    %v579 = vsub.f32 %v400, %v535
    %v580 = vsub.f32 %v404, %v498
    %v581 = vsub.f32 %v406, %v535
    %v582 = vsub.f32 %v410, %v498
    %v583 = vsub.f32 %v412, %v535
    %v584 = vsub.f32 %v416, %v498
    %v585 = vsub.f32 %v418, %v535
    %v586 = vsub.f32 %v422, %v498
    %v587 = vsub.f32 %v424, %v535
    %v588 = vsub.f32 %v428, %v498
    %v589 = vsub.f32 %v430, %v535
    %v590 = vsub.f32 %v434, %v498
    %v591 = vsub.f32 %v436, %v535
    %v592 = vsub.f32 %v440, %v498
    %v593 = vsub.f32 %v442, %v535
    %v594 = vsub.f32 %v446, %v498
    %v595 = vsub.f32 %v448, %v535
    %v596 = vsub.f32 %v452, %v498
    %v597 = vsub.f32 %v454, %v535
    %v598 = vsub.f32 %v458, %v498
    %v599 = vsub.f32 %v460, %v535
    %v600 = vmul.f32 %v536, 1.442695
    %v601 = vpow.pop %v600
    %v602 = vmul.f32 %v537, 1.442695
    %v603 = vpow.pop %v602
    %v604 = vmul.f32 %v538, 1.442695
    %v605 = vpow.pop %v604
    %v606 = vmul.f32 %v539, 1.442695
    %v607 = vpow.pop %v606
    %v608 = vmul.f32 %v540, 1.442695
    %v609 = vpow.pop %v608
    %v610 = vmul.f32 %v541, 1.442695
    %v611 = vpow.pop %v610
    %v612 = vmul.f32 %v542, 1.442695
    %v613 = vpow.pop %v612
    %v614 = vmul.f32 %v543, 1.442695
    %v615 = vpow.pop %v614
    %v616 = vmul.f32 %v544, 1.442695
    %v617 = vpow.pop %v616
    %v618 = vmul.f32 %v545, 1.442695
    %v619 = vpow.pop %v618
    %v620 = vmul.f32 %v546, 1.442695
    %v621 = vpow.pop %v620
    %v622 = vmul.f32 %v547, 1.442695
    %v623 = vpow.pop %v622
    %v624 = vmul.f32 %v548, 1.442695
    %v625 = vpow.pop %v624
    %v626 = vmul.f32 %v549, 1.442695
    %v627 = vpow.pop %v626
    %v628 = vmul.f32 %v550, 1.442695
    %v629 = vpow.pop %v628
    %v630 = vmul.f32 %v551, 1.442695
    %v631 = vpow.pop %v630
    %v632 = vmul.f32 %v552, 1.442695
    %v633 = vpow.pop %v632
    %v634 = vmul.f32 %v553, 1.442695
    %v635 = vpow.pop %v634
    %v636 = vmul.f32 %v554, 1.442695
    %v637 = vpow.pop %v636
    %v638 = vmul.f32 %v555, 1.442695
    %v639 = vpow.pop %v638
    %v640 = vmul.f32 %v556, 1.442695
    %v641 = vpow.pop %v640
    %v642 = vmul.f32 %v557, 1.442695
    %v643 = vpow.pop %v642
    %v644 = vmul.f32 %v558, 1.442695
    %v645 = vpow.pop %v644
    %v646 = vmul.f32 %v559, 1.442695
    %v647 = vpow.pop %v646
    %v648 = vmul.f32 %v560, 1.442695
    %v649 = vpow.pop %v648
    %v650 = vmul.f32 %v561, 1.442695
    %v651 = vpow.pop %v650
    %v652 = vmul.f32 %v562, 1.442695
    %v653 = vpow.pop %v652
    %v654 = vmul.f32 %v563, 1.442695
    %v655 = vpow.pop %v654
    %v656 = vmul.f32 %v564, 1.442695
    %v657 = vpow.pop %v656
    %v658 = vmul.f32 %v565, 1.442695
    %v659 = vpow.pop %v658
    %v660 = vmul.f32 %v566, 1.442695
    %v661 = vpow.pop %v660
    %v662 = vmul.f32 %v567, 1.442695
    %v663 = vpow.pop %v662
    %v664 = vmul.f32 %v568, 1.442695
    %v665 = vpow.pop %v664
    %v666 = vmul.f32 %v569, 1.442695
    %v667 = vpow.pop %v666
    %v668 = vmul.f32 %v570, 1.442695
    %v669 = vpow.pop %v668
    %v670 = vmul.f32 %v571, 1.442695
    %v671 = vpow.pop %v670
    %v672 = vmul.f32 %v572, 1.442695
    %v673 = vpow.pop %v672
    %v674 = vmul.f32 %v573, 1.442695
    %v675 = vpow.pop %v674
    %v676 = vmul.f32 %v574, 1.442695
    %v677 = vpow.pop %v676
    %v678 = vmul.f32 %v575, 1.442695
    %v679 = vpow.pop %v678
    %v680 = vmul.f32 %v576, 1.442695
    %v681 = vpow.pop %v680
    %v682 = vmul.f32 %v577, 1.442695
    %v683 = vpow.pop %v682
    %v684 = vmul.f32 %v578, 1.442695
    %v685 = vpow.pop %v684
    %v686 = vmul.f32 %v579, 1.442695
    %v687 = vpow.pop %v686
    %v688 = vmul.f32 %v580, 1.442695
    %v689 = vpow.pop %v688
    %v690 = vmul.f32 %v581, 1.442695
    %v691 = vpow.pop %v690
    %v692 = vmul.f32 %v582, 1.442695
    %v693 = vpow.pop %v692
    %v694 = vmul.f32 %v583, 1.442695
    %v695 = vpow.pop %v694
    %v696 = vmul.f32 %v584, 1.442695
    %v697 = vpow.pop %v696
    %v698 = vmul.f32 %v585, 1.442695
    %v699 = vpow.pop %v698
    %v700 = vmul.f32 %v586, 1.442695
    %v701 = vpow.pop %v700
    %v702 = vmul.f32 %v587, 1.442695
    %v703 = vpow.pop %v702
    %v704 = vmul.f32 %v588, 1.442695
    %v705 = vpow.pop %v704
    %v706 = vmul.f32 %v589, 1.442695
    %v707 = vpow.pop %v706
    %v708 = vmul.f32 %v590, 1.442695
    %v709 = vpow.pop %v708
    %v710 = vmul.f32 %v591, 1.442695
    %v711 = vpow.pop %v710
    %v712 = vmul.f32 %v592, 1.442695
    %v713 = vpow.pop %v712
    %v714 = vmul.f32 %v593, 1.442695
    %v715 = vpow.pop %v714
    %v716 = vmul.f32 %v594, 1.442695
    %v717 = vpow.pop %v716
    %v718 = vmul.f32 %v595, 1.442695
    %v719 = vpow.pop %v718
    %v720 = vmul.f32 %v596, 1.442695
    %v721 = vpow.pop %v720
    %v722 = vmul.f32 %v597, 1.442695
    %v723 = vpow.pop %v722
    %v724 = vmul.f32 %v598, 1.442695
    %v725 = vpow.pop %v724
    %v726 = vmul.f32 %v599, 1.442695
    %v727 = vpow.pop %v726
    %728 = vst [vmem:[#allocation7] sm:$0xff] %v601
    %729 = vst [vmem:[#allocation7 + $0x8] sm:$0xff] %v603
    %730 = vst [vmem:[#allocation7 + $0x10] sm:$0xff] %v605
    %731 = vst [vmem:[#allocation7 + $0x18] sm:$0xff] %v607
    %732 = vst [vmem:[#allocation7 + $0x20] sm:$0xff] %v609
    %733 = vst [vmem:[#allocation7 + $0x28] sm:$0xff] %v611
    %734 = vst [vmem:[#allocation7 + $0x30] sm:$0xff] %v613
    %735 = vst [vmem:[#allocation7 + $0x38] sm:$0xff] %v615
    %736 = vst [vmem:[#allocation7 + $0x40] sm:$0xff] %v617
    %737 = vst [vmem:[#allocation7 + $0x48] sm:$0xff] %v619
    %738 = vst [vmem:[#allocation7 + $0x50] sm:$0xff] %v621
    %739 = vst [vmem:[#allocation7 + $0x58] sm:$0xff] %v623
    %740 = vst [vmem:[#allocation7 + $0x60] sm:$0xff] %v625
    %741 = vst [vmem:[#allocation7 + $0x68] sm:$0xff] %v627
    %742 = vst [vmem:[#allocation7 + $0x70] sm:$0xff] %v629
    %743 = vst [vmem:[#allocation7 + $0x78] sm:$0xff] %v631
    %744 = vst [vmem:[#allocation7 + $0x80] sm:$0xff] %v633
    %745 = vst [vmem:[#allocation7 + $0x88] sm:$0xff] %v635
    %746 = vst [vmem:[#allocation7 + $0x90] sm:$0xff] %v637
    %747 = vst [vmem:[#allocation7 + $0x98] sm:$0xff] %v639
    %748 = vst [vmem:[#allocation7 + $0xa0] sm:$0xff] %v641
    %749 = vst [vmem:[#allocation7 + $0xa8] sm:$0xff] %v643
    %750 = vst [vmem:[#allocation7 + $0xb0] sm:$0xff] %v645
    %751 = vst [vmem:[#allocation7 + $0xb8] sm:$0xff] %v647
    %752 = vst [vmem:[#allocation7 + $0xc0] sm:$0xff] %v649
    %753 = vst [vmem:[#allocation7 + $0xc8] sm:$0xff] %v651
    %754 = vst [vmem:[#allocation7 + $0xd0] sm:$0xff] %v653
    %755 = vst [vmem:[#allocation7 + $0xd8] sm:$0xff] %v655
    %756 = vst [vmem:[#allocation7 + $0xe0] sm:$0xff] %v657
    %757 = vst [vmem:[#allocation7 + $0xe8] sm:$0xff] %v659
    %758 = vst [vmem:[#allocation7 + $0xf0] sm:$0xff] %v661
    %759 = vst [vmem:[#allocation7 + $0xf8] sm:$0xff] %v663
    %760 = vst [vmem:[#allocation7 + $0x100] sm:$0xff] %v665
    %761 = vst [vmem:[#allocation7 + $0x108] sm:$0xff] %v667
    %762 = vst [vmem:[#allocation7 + $0x110] sm:$0xff] %v669
    %763 = vst [vmem:[#allocation7 + $0x118] sm:$0xff] %v671
    %764 = vst [vmem:[#allocation7 + $0x120] sm:$0xff] %v673
    %765 = vst [vmem:[#allocation7 + $0x128] sm:$0xff] %v675
    %766 = vst [vmem:[#allocation7 + $0x130] sm:$0xff] %v677
    %767 = vst [vmem:[#allocation7 + $0x138] sm:$0xff] %v679
    %768 = vst [vmem:[#allocation7 + $0x140] sm:$0xff] %v681
    %769 = vst [vmem:[#allocation7 + $0x148] sm:$0xff] %v683
    %770 = vst [vmem:[#allocation7 + $0x150] sm:$0xff] %v685
    %771 = vst [vmem:[#allocation7 + $0x158] sm:$0xff] %v687
    %772 = vst [vmem:[#allocation7 + $0x160] sm:$0xff] %v689
    %773 = vst [vmem:[#allocation7 + $0x168] sm:$0xff] %v691
    %774 = vst [vmem:[#allocation7 + $0x170] sm:$0xff] %v693
    %775 = vst [vmem:[#allocation7 + $0x178] sm:$0xff] %v695
    %776 = vst [vmem:[#allocation7 + $0x180] sm:$0xff] %v697
    %777 = vst [vmem:[#allocation7 + $0x188] sm:$0xff] %v699
    %778 = vst [vmem:[#allocation7 + $0x190] sm:$0xff] %v701
    %779 = vst [vmem:[#allocation7 + $0x198] sm:$0xff] %v703
    %780 = vst [vmem:[#allocation7 + $0x1a0] sm:$0xff] %v705
    %781 = vst [vmem:[#allocation7 + $0x1a8] sm:$0xff] %v707
    %782 = vst [vmem:[#allocation7 + $0x1b0] sm:$0xff] %v709
    %783 = vst [vmem:[#allocation7 + $0x1b8] sm:$0xff] %v711
    %784 = vst [vmem:[#allocation7 + $0x1c0] sm:$0xff] %v713
    %785 = vst [vmem:[#allocation7 + $0x1c8] sm:$0xff] %v715
    %786 = vst [vmem:[#allocation7 + $0x1d0] sm:$0xff] %v717
    %787 = vst [vmem:[#allocation7 + $0x1d8] sm:$0xff] %v719
    %788 = vst [vmem:[#allocation7 + $0x1e0] sm:$0xff] %v721
    %789 = vst [vmem:[#allocation7 + $0x1e8] sm:$0xff] %v723
    %790 = vst [vmem:[#allocation7 + $0x1f0] sm:$0xff] %v725
    %791 = vst [vmem:[#allocation7 + $0x1f8] sm:$0xff] %v727
    %v792 = vld [vmem:[#allocation7] sm:$0xff]
    %v793 = vld [vmem:[#allocation7 + $0x8] sm:$0xff]
    %v794 = vld [vmem:[#allocation7 + $0x10] sm:$0xff]
    %v795 = vld [vmem:[#allocation7 + $0x18] sm:$0xff]
    %v796 = vld [vmem:[#allocation7 + $0x20] sm:$0xff]
    %v797 = vld [vmem:[#allocation7 + $0x28] sm:$0xff]
    %v798 = vld [vmem:[#allocation7 + $0x30] sm:$0xff]
    %v799 = vld [vmem:[#allocation7 + $0x38] sm:$0xff]
    %v800 = vld [vmem:[#allocation7 + $0x40] sm:$0xff]
    %v801 = vld [vmem:[#allocation7 + $0x48] sm:$0xff]
    %v802 = vld [vmem:[#allocation7 + $0x50] sm:$0xff]
    %v803 = vld [vmem:[#allocation7 + $0x58] sm:$0xff]
    %v804 = vld [vmem:[#allocation7 + $0x60] sm:$0xff]
    %v805 = vld [vmem:[#allocation7 + $0x68] sm:$0xff]
    %v806 = vld [vmem:[#allocation7 + $0x70] sm:$0xff]
    %v807 = vld [vmem:[#allocation7 + $0x78] sm:$0xff]
    %v808 = vld [vmem:[#allocation7 + $0x80] sm:$0xff]
    %v809 = vld [vmem:[#allocation7 + $0x88] sm:$0xff]
    %v810 = vld [vmem:[#allocation7 + $0x90] sm:$0xff]
    %v811 = vld [vmem:[#allocation7 + $0x98] sm:$0xff]
    %v812 = vld [vmem:[#allocation7 + $0xa0] sm:$0xff]
    %v813 = vld [vmem:[#allocation7 + $0xa8] sm:$0xff]
    %v814 = vld [vmem:[#allocation7 + $0xb0] sm:$0xff]
    %v815 = vld [vmem:[#allocation7 + $0xb8] sm:$0xff]
    %v816 = vld [vmem:[#allocation7 + $0xc0] sm:$0xff]
    %v817 = vld [vmem:[#allocation7 + $0xc8] sm:$0xff]
    %v818 = vld [vmem:[#allocation7 + $0xd0] sm:$0xff]
    %v819 = vld [vmem:[#allocation7 + $0xd8] sm:$0xff]
    %v820 = vld [vmem:[#allocation7 + $0xe0] sm:$0xff]
    %v821 = vld [vmem:[#allocation7 + $0xe8] sm:$0xff]
    %v822 = vld [vmem:[#allocation7 + $0xf0] sm:$0xff]
    %v823 = vld [vmem:[#allocation7 + $0xf8] sm:$0xff]
    %v824 = vld [vmem:[#allocation7 + $0x100] sm:$0xff]
    %v825 = vld [vmem:[#allocation7 + $0x108] sm:$0xff]
    %v826 = vld [vmem:[#allocation7 + $0x110] sm:$0xff]
    %v827 = vld [vmem:[#allocation7 + $0x118] sm:$0xff]
    %v828 = vld [vmem:[#allocation7 + $0x120] sm:$0xff]
    %v829 = vld [vmem:[#allocation7 + $0x128] sm:$0xff]
    %v830 = vld [vmem:[#allocation7 + $0x130] sm:$0xff]
    %v831 = vld [vmem:[#allocation7 + $0x138] sm:$0xff]
    %v832 = vld [vmem:[#allocation7 + $0x140] sm:$0xff]
    %v833 = vld [vmem:[#allocation7 + $0x148] sm:$0xff]
    %v834 = vld [vmem:[#allocation7 + $0x150] sm:$0xff]
    %v835 = vld [vmem:[#allocation7 + $0x158] sm:$0xff]
    %v836 = vld [vmem:[#allocation7 + $0x160] sm:$0xff]
    %v837 = vld [vmem:[#allocation7 + $0x168] sm:$0xff]
    %v838 = vld [vmem:[#allocation7 + $0x170] sm:$0xff]
    %v839 = vld [vmem:[#allocation7 + $0x178] sm:$0xff]
    %v840 = vld [vmem:[#allocation7 + $0x180] sm:$0xff]
    %v841 = vld [vmem:[#allocation7 + $0x188] sm:$0xff]
    %v842 = vld [vmem:[#allocation7 + $0x190] sm:$0xff]
    %v843 = vld [vmem:[#allocation7 + $0x198] sm:$0xff]
    %v844 = vld [vmem:[#allocation7 + $0x1a0] sm:$0xff]
    %v845 = vld [vmem:[#allocation7 + $0x1a8] sm:$0xff]
    %v846 = vld [vmem:[#allocation7 + $0x1b0] sm:$0xff]
    %v847 = vld [vmem:[#allocation7 + $0x1b8] sm:$0xff]
    %v848 = vld [vmem:[#allocation7 + $0x1c0] sm:$0xff]
    %v849 = vld [vmem:[#allocation7 + $0x1c8] sm:$0xff]
    %v850 = vld [vmem:[#allocation7 + $0x1d0] sm:$0xff]
    %v851 = vld [vmem:[#allocation7 + $0x1d8] sm:$0xff]
    %v852 = vld [vmem:[#allocation7 + $0x1e0] sm:$0xff]
    %v853 = vld [vmem:[#allocation7 + $0x1e8] sm:$0xff]
    %v854 = vld [vmem:[#allocation7 + $0x1f0] sm:$0xff]
    %v855 = vld [vmem:[#allocation7 + $0x1f8] sm:$0xff]
    %v856 = vadd.f32 %v792, %v794
    %v857 = vadd.f32 %v856, %v796
    %v858 = vadd.f32 %v857, %v798
    %v859 = vadd.f32 %v858, %v800
    %v860 = vadd.f32 %v859, %v802
    %v861 = vadd.f32 %v860, %v804
    %v862 = vadd.f32 %v861, %v806
    %v863 = vadd.f32 %v862, %v808
    %v864 = vadd.f32 %v863, %v810
    %v865 = vadd.f32 %v864, %v812
    %v866 = vadd.f32 %v865, %v814
    %v867 = vadd.f32 %v866, %v816
    %v868 = vadd.f32 %v867, %v818
    %v869 = vadd.f32 %v868, %v820
    %v870 = vadd.f32 %v869, %v822
    %v871 = vadd.f32 %v870, %v824
    %v872 = vadd.f32 %v871, %v826
    %v873 = vadd.f32 %v872, %v828
    %v874 = vadd.f32 %v873, %v830
    %v875 = vadd.f32 %v874, %v832
    %v876 = vadd.f32 %v875, %v834
    %v877 = vadd.f32 %v876, %v836
    %v878 = vadd.f32 %v877, %v838
    %v879 = vadd.f32 %v878, %v840
    %v880 = vadd.f32 %v879, %v842
    %v881 = vadd.f32 %v880, %v844
    %v882 = vadd.f32 %v881, %v846
    %v883 = vadd.f32 %v882, %v848
    %v884 = vadd.f32 %v883, %v850
    %v885 = vadd.f32 %v884, %v852
    %v886 = vadd.f32 %v885, %v854
    %v887 = vrot.slane %v886, 4
    %v888 = vadd.f32 %v886, %v887
    %v889 = vrot.slane %v888, 2
    %v890 = vadd.f32 %v888, %v889
    %v891 = vrot.slane %v890, 1
    %v892 = vadd.f32 %v890, %v891
    %v893 = vadd.f32 %v793, %v795
    %v894 = vadd.f32 %v893, %v797
    %v895 = vadd.f32 %v894, %v799
    %v896 = vadd.f32 %v895, %v801
    %v897 = vadd.f32 %v896, %v803
    %v898 = vadd.f32 %v897, %v805
    %v899 = vadd.f32 %v898, %v807
    %v900 = vadd.f32 %v899, %v809
    %v901 = vadd.f32 %v900, %v811
    %v902 = vadd.f32 %v901, %v813
    %v903 = vadd.f32 %v902, %v815
    %v904 = vadd.f32 %v903, %v817
    %v905 = vadd.f32 %v904, %v819
    %v906 = vadd.f32 %v905, %v821
    %v907 = vadd.f32 %v906, %v823
    %v908 = vadd.f32 %v907, %v825
    %v909 = vadd.f32 %v908, %v827
    %v910 = vadd.f32 %v909, %v829
    %v911 = vadd.f32 %v910, %v831
    %v912 = vadd.f32 %v911, %v833
    %v913 = vadd.f32 %v912, %v835
    %v914 = vadd.f32 %v913, %v837
    %v915 = vadd.f32 %v914, %v839
    %v916 = vadd.f32 %v915, %v841
    %v917 = vadd.f32 %v916, %v843
    %v918 = vadd.f32 %v917, %v845
    %v919 = vadd.f32 %v918, %v847
    %v920 = vadd.f32 %v919, %v849
    %v921 = vadd.f32 %v920, %v851
    %v922 = vadd.f32 %v921, %v853
    %v923 = vadd.f32 %v922, %v855
    %v924 = vrot.slane %v923, 4
    %v925 = vadd.f32 %v923, %v924
    %v926 = vrot.slane %v925, 2
    %v927 = vadd.f32 %v925, %v926
    %v928 = vrot.slane %v927, 1
    %v929 = vadd.f32 %v927, %v928
    %v930 = vrcp.pop %v892
    %v931 = vrcp.pop %v929
    %v932 = vmul.f32 %v892, %v930
    %v933 = vmul.f32 %v929, %v931
    %v934 = vsub.f32 2.0, %v932
    %v935 = vsub.f32 2.0, %v933
    %v936 = vmul.f32 %v930, %v934
    %v937 = vmul.f32 %v931, %v935
    %v938 = vmul.f32 %v792, %v936
    %v939 = vmul.f32 %v793, %v937
    %v940 = vmul.f32 %v794, %v936
    %v941 = vmul.f32 %v795, %v937
    %v942 = vmul.f32 %v796, %v936
    %v943 = vmul.f32 %v797, %v937
    %v944 = vmul.f32 %v798, %v936
    %v945 = vmul.f32 %v799, %v937
    %v946 = vmul.f32 %v800, %v936
    %v947 = vmul.f32 %v801, %v937
    %v948 = vmul.f32 %v802, %v936
    %v949 = vmul.f32 %v803, %v937
    %v950 = vmul.f32 %v804, %v936
    %v951 = vmul.f32 %v805, %v937
    %v952 = vmul.f32 %v806, %v936
    %v953 = vmul.f32 %v807, %v937
    %v954 = vmul.f32 %v808, %v936
    %v955 = vmul.f32 %v809, %v937
    %v956 = vmul.f32 %v810, %v936
    %v957 = vmul.f32 %v811, %v937
    %v958 = vmul.f32 %v812, %v936
    %v959 = vmul.f32 %v813, %v937
    %v960 = vmul.f32 %v814, %v936
    %v961 = vmul.f32 %v815, %v937
    %v962 = vmul.f32 %v816, %v936
    %v963 = vmul.f32 %v817, %v937
    %v964 = vmul.f32 %v818, %v936
    %v965 = vmul.f32 %v819, %v937
    %v966 = vmul.f32 %v820, %v936
    %v967 = vmul.f32 %v821, %v937
    %v968 = vmul.f32 %v822, %v936
    %v969 = vmul.f32 %v823, %v937
    %v970 = vmul.f32 %v824, %v936
    %v971 = vmul.f32 %v825, %v937
    %v972 = vmul.f32 %v826, %v936
    %v973 = vmul.f32 %v827, %v937
    %v974 = vmul.f32 %v828, %v936
    %v975 = vmul.f32 %v829, %v937
    %v976 = vmul.f32 %v830, %v936
    %v977 = vmul.f32 %v831, %v937
    %v978 = vmul.f32 %v832, %v936
    %v979 = vmul.f32 %v833, %v937
    %v980 = vmul.f32 %v834, %v936
    %v981 = vmul.f32 %v835, %v937
    %v982 = vmul.f32 %v836, %v936
    %v983 = vmul.f32 %v837, %v937
    %v984 = vmul.f32 %v838, %v936
    %v985 = vmul.f32 %v839, %v937
    %v986 = vmul.f32 %v840, %v936
    %v987 = vmul.f32 %v841, %v937
    %v988 = vmul.f32 %v842, %v936
    %v989 = vmul.f32 %v843, %v937
    %v990 = vmul.f32 %v844, %v936
    %v991 = vmul.f32 %v845, %v937
    %v992 = vmul.f32 %v846, %v936
    %v993 = vmul.f32 %v847, %v937
    %v994 = vmul.f32 %v848, %v936
    %v995 = vmul.f32 %v849, %v937
    %v996 = vmul.f32 %v850, %v936
    %v997 = vmul.f32 %v851, %v937
    %v998 = vmul.f32 %v852, %v936
    %v999 = vmul.f32 %v853, %v937
    %v1000 = vmul.f32 %v854, %v936
    %v1001 = vmul.f32 %v855, %v937
    %1002 = vst [vmem:[#allocation7] sm:$0xff] %v938
    %1003 = vst [vmem:[#allocation7 + $0x8] sm:$0xff] %v939
    %1004 = vst [vmem:[#allocation7 + $0x10] sm:$0xff] %v940
    %1005 = vst [vmem:[#allocation7 + $0x18] sm:$0xff] %v941
    %1006 = vst [vmem:[#allocation7 + $0x20] sm:$0xff] %v942
    %1007 = vst [vmem:[#allocation7 + $0x28] sm:$0xff] %v943
    %1008 = vst [vmem:[#allocation7 + $0x30] sm:$0xff] %v944
    %1009 = vst [vmem:[#allocation7 + $0x38] sm:$0xff] %v945
    %1010 = vst [vmem:[#allocation7 + $0x40] sm:$0xff] %v946
    %1011 = vst [vmem:[#allocation7 + $0x48] sm:$0xff] %v947
    %1012 = vst [vmem:[#allocation7 + $0x50] sm:$0xff] %v948
    %1013 = vst [vmem:[#allocation7 + $0x58] sm:$0xff] %v949
    %1014 = vst [vmem:[#allocation7 + $0x60] sm:$0xff] %v950
    %1015 = vst [vmem:[#allocation7 + $0x68] sm:$0xff] %v951
    %1016 = vst [vmem:[#allocation7 + $0x70] sm:$0xff] %v952
    %1017 = vst [vmem:[#allocation7 + $0x78] sm:$0xff] %v953
    %1018 = vst [vmem:[#allocation7 + $0x80] sm:$0xff] %v954
    %1019 = vst [vmem:[#allocation7 + $0x88] sm:$0xff] %v955
    %1020 = vst [vmem:[#allocation7 + $0x90] sm:$0xff] %v956
    %1021 = vst [vmem:[#allocation7 + $0x98] sm:$0xff] %v957
    %1022 = vst [vmem:[#allocation7 + $0xa0] sm:$0xff] %v958
    %1023 = vst [vmem:[#allocation7 + $0xa8] sm:$0xff] %v959
    %1024 = vst [vmem:[#allocation7 + $0xb0] sm:$0xff] %v960
    %1025 = vst [vmem:[#allocation7 + $0xb8] sm:$0xff] %v961
    %1026 = vst [vmem:[#allocation7 + $0xc0] sm:$0xff] %v962
    %1027 = vst [vmem:[#allocation7 + $0xc8] sm:$0xff] %v963
    %1028 = vst [vmem:[#allocation7 + $0xd0] sm:$0xff] %v964
    %1029 = vst [vmem:[#allocation7 + $0xd8] sm:$0xff] %v965
    %1030 = vst [vmem:[#allocation7 + $0xe0] sm:$0xff] %v966
    %1031 = vst [vmem:[#allocation7 + $0xe8] sm:$0xff] %v967
    %1032 = vst [vmem:[#allocation7 + $0xf0] sm:$0xff] %v968
    %1033 = vst [vmem:[#allocation7 + $0xf8] sm:$0xff] %v969
    %1034 = vst [vmem:[#allocation7 + $0x100] sm:$0xff] %v970
    %1035 = vst [vmem:[#allocation7 + $0x108] sm:$0xff] %v971
    %1036 = vst [vmem:[#allocation7 + $0x110] sm:$0xff] %v972
    %1037 = vst [vmem:[#allocation7 + $0x118] sm:$0xff] %v973
    %1038 = vst [vmem:[#allocation7 + $0x120] sm:$0xff] %v974
    %1039 = vst [vmem:[#allocation7 + $0x128] sm:$0xff] %v975
    %1040 = vst [vmem:[#allocation7 + $0x130] sm:$0xff] %v976
    %1041 = vst [vmem:[#allocation7 + $0x138] sm:$0xff] %v977
    %1042 = vst [vmem:[#allocation7 + $0x140] sm:$0xff] %v978
    %1043 = vst [vmem:[#allocation7 + $0x148] sm:$0xff] %v979
    %1044 = vst [vmem:[#allocation7 + $0x150] sm:$0xff] %v980
    %1045 = vst [vmem:[#allocation7 + $0x158] sm:$0xff] %v981
    %1046 = vst [vmem:[#allocation7 + $0x160] sm:$0xff] %v982
    %1047 = vst [vmem:[#allocation7 + $0x168] sm:$0xff] %v983
    %1048 = vst [vmem:[#allocation7 + $0x170] sm:$0xff] %v984
    %1049 = vst [vmem:[#allocation7 + $0x178] sm:$0xff] %v985
    %1050 = vst [vmem:[#allocation7 + $0x180] sm:$0xff] %v986
    %1051 = vst [vmem:[#allocation7 + $0x188] sm:$0xff] %v987
    %1052 = vst [vmem:[#allocation7 + $0x190] sm:$0xff] %v988
    %1053 = vst [vmem:[#allocation7 + $0x198] sm:$0xff] %v989
    %1054 = vst [vmem:[#allocation7 + $0x1a0] sm:$0xff] %v990
    %1055 = vst [vmem:[#allocation7 + $0x1a8] sm:$0xff] %v991
    %1056 = vst [vmem:[#allocation7 + $0x1b0] sm:$0xff] %v992
    %1057 = vst [vmem:[#allocation7 + $0x1b8] sm:$0xff] %v993
    %1058 = vst [vmem:[#allocation7 + $0x1c0] sm:$0xff] %v994
    %1059 = vst [vmem:[#allocation7 + $0x1c8] sm:$0xff] %v995
    %1060 = vst [vmem:[#allocation7 + $0x1d0] sm:$0xff] %v996
    %1061 = vst [vmem:[#allocation7 + $0x1d8] sm:$0xff] %v997
    %1062 = vst [vmem:[#allocation7 + $0x1e0] sm:$0xff] %v998
    %1063 = vst [vmem:[#allocation7 + $0x1e8] sm:$0xff] %v999
    %1064 = vst [vmem:[#allocation7 + $0x1f0] sm:$0xff] %v1000
    %1065 = vst [vmem:[#allocation7 + $0x1f8] sm:$0xff] %v1001
    %s1066 = scalar_lea.vmem [#allocation2], 16
    %v1067 = vld [vmem:[%s1066] sm:$0xff]
    %v1068 = vld [vmem:[%s1066 + $0x8] sm:$0xff]
    %s1069 = scalar_lea.vmem [#allocation5], 16
    %v1070 = vld [vmem:[%s1069] sm:$0xff]
    %v1071 = vld [vmem:[%s1069 + $0x8] sm:$0xff]
    %1072 = vxpose.xlu0.b32.start [1/16] %v1067, 128
    %1073 = vxpose.xlu0.b32.cont [2/16] 0.0, 128
    %1074 = vxpose.xlu0.b32.cont [3/16] 0.0, 128
    %1075 = vxpose.xlu0.b32.cont [4/16] 0.0, 128
    %1076 = vxpose.xlu0.b32.cont [5/16] 0.0, 128
    %1077 = vxpose.xlu0.b32.cont [6/16] 0.0, 128
    %1078 = vxpose.xlu0.b32.cont [7/16] 0.0, 128
    %1079 = vxpose.xlu0.b32.cont [8/16] 0.0, 128
    %1080 = vxpose.xlu0.b32.cont [9/16] 0.0, 128
    %1081 = vxpose.xlu0.b32.cont [10/16] 0.0, 128
    %1082 = vxpose.xlu0.b32.cont [11/16] 0.0, 128
    %1083 = vxpose.xlu0.b32.cont [12/16] 0.0, 128
    %1084 = vxpose.xlu0.b32.cont [13/16] 0.0, 128
    %1085 = vxpose.xlu0.b32.cont [14/16] 0.0, 128
    %1086 = vxpose.xlu0.b32.cont [15/16] 0.0, 128
    %1087 = vxpose.xlu0.b32.end [16/16] 0.0, 128
    %v1088 = vpop.trf.xlu0
    %v1089 = vpop.trf.xlu0
    %v1090 = vpop.trf.xlu0
    %v1091 = vpop.trf.xlu0
    %v1092 = vpop.trf.xlu0
    %v1093 = vpop.trf.xlu0
    %v1094 = vpop.trf.xlu0
    %v1095 = vpop.trf.xlu0
    %v1096 = vpop.trf.xlu0
    %v1097 = vpop.trf.xlu0
    %v1098 = vpop.trf.xlu0
    %v1099 = vpop.trf.xlu0
    %v1100 = vpop.trf.xlu0
    %v1101 = vpop.trf.xlu0
    %v1102 = vpop.trf.xlu0
    %v1103 = vpop.trf.xlu0
    %1104 = vxpose.xlu0.b32.start [1/16] %v1068, 128
    %1105 = vxpose.xlu0.b32.cont [2/16] 0.0, 128
    %1106 = vxpose.xlu0.b32.cont [3/16] 0.0, 128
    %1107 = vxpose.xlu0.b32.cont [4/16] 0.0, 128
    %1108 = vxpose.xlu0.b32.cont [5/16] 0.0, 128
    %1109 = vxpose.xlu0.b32.cont [6/16] 0.0, 128
    %1110 = vxpose.xlu0.b32.cont [7/16] 0.0, 128
    %1111 = vxpose.xlu0.b32.cont [8/16] 0.0, 128
    %1112 = vxpose.xlu0.b32.cont [9/16] 0.0, 128
    %1113 = vxpose.xlu0.b32.cont [10/16] 0.0, 128
    %1114 = vxpose.xlu0.b32.cont [11/16] 0.0, 128
    %1115 = vxpose.xlu0.b32.cont [12/16] 0.0, 128
    %1116 = vxpose.xlu0.b32.cont [13/16] 0.0, 128
    %1117 = vxpose.xlu0.b32.cont [14/16] 0.0, 128
    %1118 = vxpose.xlu0.b32.cont [15/16] 0.0, 128
    %1119 = vxpose.xlu0.b32.end [16/16] 0.0, 128
    %v1120 = vpop.trf.xlu0
    %v1121 = vpop.trf.xlu0
    %v1122 = vpop.trf.xlu0
    %v1123 = vpop.trf.xlu0
    %v1124 = vpop.trf.xlu0
    %v1125 = vpop.trf.xlu0
    %v1126 = vpop.trf.xlu0
    %v1127 = vpop.trf.xlu0
    %v1128 = vpop.trf.xlu0
    %v1129 = vpop.trf.xlu0
    %v1130 = vpop.trf.xlu0
    %v1131 = vpop.trf.xlu0
    %v1132 = vpop.trf.xlu0
    %v1133 = vpop.trf.xlu0
    %v1134 = vpop.trf.xlu0
    %v1135 = vpop.trf.xlu0
    %v1137 = vsel %vm108, %v1088, 0
    %v1140 = vsel %vm108, %v1089, 0
    %v1143 = vsel %vm108, %v1090, 0
    %v1146 = vsel %vm108, %v1091, 0
    %v1149 = vsel %vm108, %v1092, 0
    %v1152 = vsel %vm108, %v1093, 0
    %v1155 = vsel %vm108, %v1094, 0
    %v1158 = vsel %vm108, %v1095, 0
    %v1161 = vsel %vm108, %v1096, 0
    %v1164 = vsel %vm108, %v1097, 0
    %v1167 = vsel %vm108, %v1098, 0
    %v1170 = vsel %vm108, %v1099, 0
    %v1173 = vsel %vm108, %v1100, 0
    %v1176 = vsel %vm108, %v1101, 0
    %v1179 = vsel %vm108, %v1102, 0
    %v1182 = vsel %vm108, %v1103, 0
    %v1185 = vsel %vm108, %v1120, 0
    %v1188 = vsel %vm108, %v1121, 0
    %v1191 = vsel %vm108, %v1122, 0
    %v1194 = vsel %vm108, %v1123, 0
    %v1197 = vsel %vm108, %v1124, 0
    %v1200 = vsel %vm108, %v1125, 0
    %v1203 = vsel %vm108, %v1126, 0
    %v1206 = vsel %vm108, %v1127, 0
    %v1209 = vsel %vm108, %v1128, 0
    %v1212 = vsel %vm108, %v1129, 0
    %v1215 = vsel %vm108, %v1130, 0
    %v1218 = vsel %vm108, %v1131, 0
    %v1221 = vsel %vm108, %v1132, 0
    %v1224 = vsel %vm108, %v1133, 0
    %v1227 = vsel %vm108, %v1134, 0
    %v1230 = vsel %vm108, %v1135, 0
    %1232 = vmatprep.subr.mxu0 %v1071
    %1233 = vmatpush1.msra.mxu0 %v1070
    %1234 = vmatprep.subr.mxu0 0.0
    %1235 = vmatpush1.msra.mxu0 0.0
    %1236 = vmatprep.subr.mxu0 0.0
    %1237 = vmatpush1.msra.mxu0 0.0
    %1238 = vmatprep.subr.mxu0 0.0
    %1239 = vmatpush1.msra.mxu0 0.0
    %1240 = vmatprep.subr.mxu0 0.0
    %1241 = vmatpush1.msra.mxu0 0.0
    %1242 = vmatprep.subr.mxu0 0.0
    %1243 = vmatpush1.msra.mxu0 0.0
    %1244 = vmatprep.subr.mxu0 0.0
    %1245 = vmatpush1.msra.mxu0 0.0
    %1246 = vmatprep.subr.mxu0 0.0
    %1247 = vmatpush1.msra.mxu0 0.0
    %1248 = vmatprep.subr.mxu0 0.0
    %1249 = vmatpush1.msra.mxu0 0.0
    %1250 = vmatprep.subr.mxu0 0.0
    %1251 = vmatpush1.msra.mxu0 0.0
    %1252 = vmatprep.subr.mxu0 0.0
    %1253 = vmatpush1.msra.mxu0 0.0
    %1254 = vmatprep.subr.mxu0 0.0
    %1255 = vmatpush1.msra.mxu0 0.0
    %1256 = vmatprep.subr.mxu0 0.0
    %1257 = vmatpush1.msra.mxu0 0.0
    %1258 = vmatprep.subr.mxu0 0.0
    %1259 = vmatpush1.msra.mxu0 0.0
    %1260 = vmatprep.subr.mxu0 0.0
    %1261 = vmatpush1.msra.mxu0 0.0
    %1262 = vmatprep.subr.mxu0 0.0
    %1263 = vmatpush1.msra.mxu0 0.0
    %1264 = vmatprep.subr.mxu0 0.0
    %1265 = vmatpush1.msra.mxu0 0.0
    %1266 = vmatprep.subr.mxu0 0.0
    %1267 = vmatpush1.msra.mxu0 0.0
    %1268 = vmatprep.subr.mxu0 0.0
    %1269 = vmatpush1.msra.mxu0 0.0
    %1270 = vmatprep.subr.mxu0 0.0
    %1271 = vmatpush1.msra.mxu0 0.0
    %1272 = vmatprep.subr.mxu0 0.0
    %1273 = vmatpush1.msra.mxu0 0.0
    %1274 = vmatprep.subr.mxu0 0.0
    %1275 = vmatpush1.msra.mxu0 0.0
    %1276 = vmatprep.subr.mxu0 0.0
    %1277 = vmatpush1.msra.mxu0 0.0
    %1278 = vmatprep.subr.mxu0 0.0
    %1279 = vmatpush1.msra.mxu0 0.0
    %1280 = vmatprep.subr.mxu0 0.0
    %1281 = vmatpush1.msra.mxu0 0.0
    %1282 = vmatprep.subr.mxu0 0.0
    %1283 = vmatpush1.msra.mxu0 0.0
    %1284 = vmatprep.subr.mxu0 0.0
    %1285 = vmatpush1.msra.mxu0 0.0
    %1286 = vmatprep.subr.mxu0 0.0
    %1287 = vmatpush1.msra.mxu0 0.0
    %1288 = vmatprep.subr.mxu0 0.0
    %1289 = vmatpush1.msra.mxu0 0.0
    %1290 = vmatprep.subr.mxu0 0.0
    %1291 = vmatpush1.msra.mxu0 0.0
    %1292 = vmatprep.subr.mxu0 0.0
    %1293 = vmatpush1.msra.mxu0 0.0
    %1294 = vmatprep.subr.mxu0 0.0
    %1295 = vmatpush1.msra.mxu0 0.0
    %1296 = vmatprep.mubr.f32.mxu0 0.0
    %1297 = vmatmul.mubr.f32.gmra.mrb[0].mxu0 %v1137
    %v1298 = vpop.f32.mrb[0].mxu0
    %v1299 = vadd.f32 0.0, %v1298
    %v1300 = vpop.f32.mrb[0].mxu0
    %v1301 = vadd.f32 0.0, %v1300
    %1302 = vmatprep.mubr.f32.mxu0 0.0
    %1303 = vmatmul.mubr.f32.gmra.mrb[0].mxu0 %v1140
    %v1304 = vpop.f32.mrb[0].mxu0
    %v1305 = vadd.f32 0.0, %v1304
    %v1306 = vpop.f32.mrb[0].mxu0
    %v1307 = vadd.f32 0.0, %v1306
    %1308 = vmatprep.mubr.f32.mxu0 0.0
    %1309 = vmatmul.mubr.f32.gmra.mrb[0].mxu0 %v1143
    %v1310 = vpop.f32.mrb[0].mxu0
    %v1311 = vadd.f32 0.0, %v1310
    %v1312 = vpop.f32.mrb[0].mxu0
    %v1313 = vadd.f32 0.0, %v1312
    %1314 = vmatprep.mubr.f32.mxu0 0.0
    %1315 = vmatmul.mubr.f32.gmra.mrb[0].mxu0 %v1146
    %v1316 = vpop.f32.mrb[0].mxu0
    %v1317 = vadd.f32 0.0, %v1316
    %v1318 = vpop.f32.mrb[0].mxu0
    %v1319 = vadd.f32 0.0, %v1318
    %1320 = vmatprep.mubr.f32.mxu0 0.0
    %1321 = vmatmul.mubr.f32.gmra.mrb[0].mxu0 %v1149
    %v1322 = vpop.f32.mrb[0].mxu0
    %v1323 = vadd.f32 0.0, %v1322
    %v1324 = vpop.f32.mrb[0].mxu0
    %v1325 = vadd.f32 0.0, %v1324
    %1326 = vmatprep.mubr.f32.mxu0 0.0
    %1327 = vmatmul.mubr.f32.gmra.mrb[0].mxu0 %v1152
    %v1328 = vpop.f32.mrb[0].mxu0
    %v1329 = vadd.f32 0.0, %v1328
    %v1330 = vpop.f32.mrb[0].mxu0
    %v1331 = vadd.f32 0.0, %v1330
    %1332 = vmatprep.mubr.f32.mxu0 0.0
    %1333 = vmatmul.mubr.f32.gmra.mrb[0].mxu0 %v1155
    %v1334 = vpop.f32.mrb[0].mxu0
    %v1335 = vadd.f32 0.0, %v1334
    %v1336 = vpop.f32.mrb[0].mxu0
    %v1337 = vadd.f32 0.0, %v1336
    %1338 = vmatprep.mubr.f32.mxu0 0.0
    %1339 = vmatmul.mubr.f32.gmra.mrb[0].mxu0 %v1158
    %v1340 = vpop.f32.mrb[0].mxu0
    %v1341 = vadd.f32 0.0, %v1340
    %v1342 = vpop.f32.mrb[0].mxu0
    %v1343 = vadd.f32 0.0, %v1342
    %1344 = vmatprep.mubr.f32.mxu0 0.0
    %1345 = vmatmul.mubr.f32.gmra.mrb[0].mxu0 %v1161
    %v1346 = vpop.f32.mrb[0].mxu0
    %v1347 = vadd.f32 0.0, %v1346
    %v1348 = vpop.f32.mrb[0].mxu0
    %v1349 = vadd.f32 0.0, %v1348
    %1350 = vmatprep.mubr.f32.mxu0 0.0
    %1351 = vmatmul.mubr.f32.gmra.mrb[0].mxu0 %v1164
    %v1352 = vpop.f32.mrb[0].mxu0
    %v1353 = vadd.f32 0.0, %v1352
    %v1354 = vpop.f32.mrb[0].mxu0
    %v1355 = vadd.f32 0.0, %v1354
    %1356 = vmatprep.mubr.f32.mxu0 0.0
    %1357 = vmatmul.mubr.f32.gmra.mrb[0].mxu0 %v1167
    %v1358 = vpop.f32.mrb[0].mxu0
    %v1359 = vadd.f32 0.0, %v1358
    %v1360 = vpop.f32.mrb[0].mxu0
    %v1361 = vadd.f32 0.0, %v1360
    %1362 = vmatprep.mubr.f32.mxu0 0.0
    %1363 = vmatmul.mubr.f32.gmra.mrb[0].mxu0 %v1170
    %v1364 = vpop.f32.mrb[0].mxu0
    %v1365 = vadd.f32 0.0, %v1364
    %v1366 = vpop.f32.mrb[0].mxu0
    %v1367 = vadd.f32 0.0, %v1366
    %1368 = vmatprep.mubr.f32.mxu0 0.0
    %1369 = vmatmul.mubr.f32.gmra.mrb[0].mxu0 %v1173
    %v1370 = vpop.f32.mrb[0].mxu0
    %v1371 = vadd.f32 0.0, %v1370
    %v1372 = vpop.f32.mrb[0].mxu0
    %v1373 = vadd.f32 0.0, %v1372
    %1374 = vmatprep.mubr.f32.mxu0 0.0
    %1375 = vmatmul.mubr.f32.gmra.mrb[0].mxu0 %v1176
    %v1376 = vpop.f32.mrb[0].mxu0
    %v1377 = vadd.f32 0.0, %v1376
    %v1378 = vpop.f32.mrb[0].mxu0
    %v1379 = vadd.f32 0.0, %v1378
    %1380 = vmatprep.mubr.f32.mxu0 0.0
    %1381 = vmatmul.mubr.f32.gmra.mrb[0].mxu0 %v1179
    %v1382 = vpop.f32.mrb[0].mxu0
    %v1383 = vadd.f32 0.0, %v1382
    %v1384 = vpop.f32.mrb[0].mxu0
    %v1385 = vadd.f32 0.0, %v1384
    %1386 = vmatprep.mubr.f32.mxu0 0.0
    %1387 = vmatmul.mubr.f32.gmra.mrb[0].mxu0 %v1182
    %v1388 = vpop.f32.mrb[0].mxu0
    %v1389 = vadd.f32 0.0, %v1388
    %v1390 = vpop.f32.mrb[0].mxu0
    %v1391 = vadd.f32 0.0, %v1390
    %1392 = vmatprep.mubr.f32.mxu0 0.0
    %1393 = vmatmul.mubr.f32.gmra.mrb[0].mxu0 %v1185
    %v1394 = vpop.f32.mrb[0].mxu0
    %v1395 = vadd.f32 0.0, %v1394
    %v1396 = vpop.f32.mrb[0].mxu0
    %v1397 = vadd.f32 0.0, %v1396
    %1398 = vmatprep.mubr.f32.mxu0 0.0
    %1399 = vmatmul.mubr.f32.gmra.mrb[0].mxu0 %v1188
    %v1400 = vpop.f32.mrb[0].mxu0
    %v1401 = vadd.f32 0.0, %v1400
    %v1402 = vpop.f32.mrb[0].mxu0
    %v1403 = vadd.f32 0.0, %v1402
    %1404 = vmatprep.mubr.f32.mxu0 0.0
    %1405 = vmatmul.mubr.f32.gmra.mrb[0].mxu0 %v1191
    %v1406 = vpop.f32.mrb[0].mxu0
    %v1407 = vadd.f32 0.0, %v1406
    %v1408 = vpop.f32.mrb[0].mxu0
    %v1409 = vadd.f32 0.0, %v1408
    %1410 = vmatprep.mubr.f32.mxu0 0.0
    %1411 = vmatmul.mubr.f32.gmra.mrb[0].mxu0 %v1194
    %v1412 = vpop.f32.mrb[0].mxu0
    %v1413 = vadd.f32 0.0, %v1412
    %v1414 = vpop.f32.mrb[0].mxu0
    %v1415 = vadd.f32 0.0, %v1414
    %1416 = vmatprep.mubr.f32.mxu0 0.0
    %1417 = vmatmul.mubr.f32.gmra.mrb[0].mxu0 %v1197
    %v1418 = vpop.f32.mrb[0].mxu0
    %v1419 = vadd.f32 0.0, %v1418
    %v1420 = vpop.f32.mrb[0].mxu0
    %v1421 = vadd.f32 0.0, %v1420
    %1422 = vmatprep.mubr.f32.mxu0 0.0
    %1423 = vmatmul.mubr.f32.gmra.mrb[0].mxu0 %v1200
    %v1424 = vpop.f32.mrb[0].mxu0
    %v1425 = vadd.f32 0.0, %v1424
    %v1426 = vpop.f32.mrb[0].mxu0
    %v1427 = vadd.f32 0.0, %v1426
    %1428 = vmatprep.mubr.f32.mxu0 0.0
    %1429 = vmatmul.mubr.f32.gmra.mrb[0].mxu0 %v1203
    %v1430 = vpop.f32.mrb[0].mxu0
    %v1431 = vadd.f32 0.0, %v1430
    %v1432 = vpop.f32.mrb[0].mxu0
    %v1433 = vadd.f32 0.0, %v1432
    %1434 = vmatprep.mubr.f32.mxu0 0.0
    %1435 = vmatmul.mubr.f32.gmra.mrb[0].mxu0 %v1206
    %v1436 = vpop.f32.mrb[0].mxu0
    %v1437 = vadd.f32 0.0, %v1436
    %v1438 = vpop.f32.mrb[0].mxu0
    %v1439 = vadd.f32 0.0, %v1438
    %1440 = vmatprep.mubr.f32.mxu0 0.0
    %1441 = vmatmul.mubr.f32.gmra.mrb[0].mxu0 %v1209
    %v1442 = vpop.f32.mrb[0].mxu0
    %v1443 = vadd.f32 0.0, %v1442
    %v1444 = vpop.f32.mrb[0].mxu0
    %v1445 = vadd.f32 0.0, %v1444
    %1446 = vmatprep.mubr.f32.mxu0 0.0
    %1447 = vmatmul.mubr.f32.gmra.mrb[0].mxu0 %v1212
    %v1448 = vpop.f32.mrb[0].mxu0
    %v1449 = vadd.f32 0.0, %v1448
    %v1450 = vpop.f32.mrb[0].mxu0
    %v1451 = vadd.f32 0.0, %v1450
    %1452 = vmatprep.mubr.f32.mxu0 0.0
    %1453 = vmatmul.mubr.f32.gmra.mrb[0].mxu0 %v1215
    %v1454 = vpop.f32.mrb[0].mxu0
    %v1455 = vadd.f32 0.0, %v1454
    %v1456 = vpop.f32.mrb[0].mxu0
    %v1457 = vadd.f32 0.0, %v1456
    %1458 = vmatprep.mubr.f32.mxu0 0.0
    %1459 = vmatmul.mubr.f32.gmra.mrb[0].mxu0 %v1218
    %v1460 = vpop.f32.mrb[0].mxu0
    %v1461 = vadd.f32 0.0, %v1460
    %v1462 = vpop.f32.mrb[0].mxu0
    %v1463 = vadd.f32 0.0, %v1462
    %1464 = vmatprep.mubr.f32.mxu0 0.0
    %1465 = vmatmul.mubr.f32.gmra.mrb[0].mxu0 %v1221
    %v1466 = vpop.f32.mrb[0].mxu0
    %v1467 = vadd.f32 0.0, %v1466
    %v1468 = vpop.f32.mrb[0].mxu0
    %v1469 = vadd.f32 0.0, %v1468
    %1470 = vmatprep.mubr.f32.mxu0 0.0
    %1471 = vmatmul.mubr.f32.gmra.mrb[0].mxu0 %v1224
    %v1472 = vpop.f32.mrb[0].mxu0
    %v1473 = vadd.f32 0.0, %v1472
    %v1474 = vpop.f32.mrb[0].mxu0
    %v1475 = vadd.f32 0.0, %v1474
    %1476 = vmatprep.mubr.f32.mxu0 0.0
    %1477 = vmatmul.mubr.f32.gmra.mrb[0].mxu0 %v1227
    %v1478 = vpop.f32.mrb[0].mxu0
    %v1479 = vadd.f32 0.0, %v1478
    %v1480 = vpop.f32.mrb[0].mxu0
    %v1481 = vadd.f32 0.0, %v1480
    %1482 = vmatprep.mubr.f32.mxu0 0.0
    %1483 = vmatmul.mubr.f32.gmra.mrb[0].mxu0 %v1230
    %v1484 = vpop.f32.mrb[0].mxu0
    %v1485 = vadd.f32 0.0, %v1484
    %v1486 = vpop.f32.mrb[0].mxu0
    %v1487 = vadd.f32 0.0, %v1486
    %1488 = vdwg.mxu0
    %v1489 = vmax.f32 %v1299, %v1311
    %v1490 = vmax.f32 %v1305, %v1317
    %v1491 = vmax.f32 %v1489, %v1323
    %v1492 = vmax.f32 %v1490, %v1329
    %v1493 = vmax.f32 %v1491, %v1335
    %v1494 = vmax.f32 %v1492, %v1341
    %v1495 = vmax.f32 %v1493, %v1347
    %v1496 = vmax.f32 %v1494, %v1353
    %v1497 = vmax.f32 %v1495, %v1359
    %v1498 = vmax.f32 %v1496, %v1365
    %v1499 = vmax.f32 %v1497, %v1371
    %v1500 = vmax.f32 %v1498, %v1377
    %v1501 = vmax.f32 %v1499, %v1383
    %v1502 = vmax.f32 %v1500, %v1389
    %v1503 = vmax.f32 %v1501, %v1395
    %v1504 = vmax.f32 %v1502, %v1401
    %v1505 = vmax.f32 %v1503, %v1407
    %v1506 = vmax.f32 %v1504, %v1413
    %v1507 = vmax.f32 %v1505, %v1419
    %v1508 = vmax.f32 %v1506, %v1425
    %v1509 = vmax.f32 %v1507, %v1431
    %v1510 = vmax.f32 %v1508, %v1437
    %v1511 = vmax.f32 %v1509, %v1443
    %v1512 = vmax.f32 %v1510, %v1449
    %v1513 = vmax.f32 %v1511, %v1455
    %v1514 = vmax.f32 %v1512, %v1461
    %v1515 = vmax.f32 %v1513, %v1467
    %v1516 = vmax.f32 %v1514, %v1473
    %v1517 = vmax.f32 %v1515, %v1479
    %v1518 = vmax.f32 %v1516, %v1485
    %v1519 = vmax.f32 %v1517, %v1518
    %v1520 = vrot.slane %v1519, 4
    %v1521 = vmax.f32 %v1519, %v1520
    %v1522 = vrot.slane %v1521, 2
    %v1523 = vmax.f32 %v1521, %v1522
    %v1524 = vrot.slane %v1523, 1
    %v1525 = vmax.f32 %v1523, %v1524
    %v1526 = vmax.f32 %v1301, %v1313
    %v1527 = vmax.f32 %v1307, %v1319
    %v1528 = vmax.f32 %v1526, %v1325
    %v1529 = vmax.f32 %v1527, %v1331
    %v1530 = vmax.f32 %v1528, %v1337
    %v1531 = vmax.f32 %v1529, %v1343
    %v1532 = vmax.f32 %v1530, %v1349
    %v1533 = vmax.f32 %v1531, %v1355
    %v1534 = vmax.f32 %v1532, %v1361
    %v1535 = vmax.f32 %v1533, %v1367
    %v1536 = vmax.f32 %v1534, %v1373
    %v1537 = vmax.f32 %v1535, %v1379
    %v1538 = vmax.f32 %v1536, %v1385
    %v1539 = vmax.f32 %v1537, %v1391
    %v1540 = vmax.f32 %v1538, %v1397
    %v1541 = vmax.f32 %v1539, %v1403
    %v1542 = vmax.f32 %v1540, %v1409
    %v1543 = vmax.f32 %v1541, %v1415
    %v1544 = vmax.f32 %v1542, %v1421
    %v1545 = vmax.f32 %v1543, %v1427
    %v1546 = vmax.f32 %v1544, %v1433
    %v1547 = vmax.f32 %v1545, %v1439
    %v1548 = vmax.f32 %v1546, %v1445
    %v1549 = vmax.f32 %v1547, %v1451
    %v1550 = vmax.f32 %v1548, %v1457
    %v1551 = vmax.f32 %v1549, %v1463
    %v1552 = vmax.f32 %v1550, %v1469
    %v1553 = vmax.f32 %v1551, %v1475
    %v1554 = vmax.f32 %v1552, %v1481
    %v1555 = vmax.f32 %v1553, %v1487
    %v1556 = vmax.f32 %v1554, %v1555
    %v1557 = vrot.slane %v1556, 4
    %v1558 = vmax.f32 %v1556, %v1557
    %v1559 = vrot.slane %v1558, 2
    %v1560 = vmax.f32 %v1558, %v1559
    %v1561 = vrot.slane %v1560, 1
    %v1562 = vmax.f32 %v1560, %v1561
    %v1563 = vsub.f32 %v1299, %v1525
    %v1564 = vsub.f32 %v1301, %v1562
    %v1565 = vsub.f32 %v1305, %v1525
    %v1566 = vsub.f32 %v1307, %v1562
    %v1567 = vsub.f32 %v1311, %v1525
    %v1568 = vsub.f32 %v1313, %v1562
    %v1569 = vsub.f32 %v1317, %v1525
    %v1570 = vsub.f32 %v1319, %v1562
    %v1571 = vsub.f32 %v1323, %v1525
    %v1572 = vsub.f32 %v1325, %v1562
    %v1573 = vsub.f32 %v1329, %v1525
    %v1574 = vsub.f32 %v1331, %v1562
    %v1575 = vsub.f32 %v1335, %v1525
    %v1576 = vsub.f32 %v1337, %v1562
    %v1577 = vsub.f32 %v1341, %v1525
    %v1578 = vsub.f32 %v1343, %v1562
    %v1579 = vsub.f32 %v1347, %v1525
    %v1580 = vsub.f32 %v1349, %v1562
    %v1581 = vsub.f32 %v1353, %v1525
    %v1582 = vsub.f32 %v1355, %v1562
    %v1583 = vsub.f32 %v1359, %v1525
    %v1584 = vsub.f32 %v1361, %v1562
    %v1585 = vsub.f32 %v1365, %v1525
    %v1586 = vsub.f32 %v1367, %v1562
    %v1587 = vsub.f32 %v1371, %v1525
    %v1588 = vsub.f32 %v1373, %v1562
    %v1589 = vsub.f32 %v1377, %v1525
    %v1590 = vsub.f32 %v1379, %v1562
    %v1591 = vsub.f32 %v1383, %v1525
    %v1592 = vsub.f32 %v1385, %v1562
    %v1593 = vsub.f32 %v1389, %v1525
    %v1594 = vsub.f32 %v1391, %v1562
    %v1595 = vsub.f32 %v1395, %v1525
    %v1596 = vsub.f32 %v1397, %v1562
    %v1597 = vsub.f32 %v1401, %v1525
    %v1598 = vsub.f32 %v1403, %v1562
    %v1599 = vsub.f32 %v1407, %v1525
    %v1600 = vsub.f32 %v1409, %v1562
    %v1601 = vsub.f32 %v1413, %v1525
    %v1602 = vsub.f32 %v1415, %v1562
    %v1603 = vsub.f32 %v1419, %v1525
    %v1604 = vsub.f32 %v1421, %v1562
    %v1605 = vsub.f32 %v1425, %v1525
    %v1606 = vsub.f32 %v1427, %v1562
    %v1607 = vsub.f32 %v1431, %v1525
    %v1608 = vsub.f32 %v1433, %v1562
    %v1609 = vsub.f32 %v1437, %v1525
    %v1610 = vsub.f32 %v1439, %v1562
    %v1611 = vsub.f32 %v1443, %v1525
    %v1612 = vsub.f32 %v1445, %v1562
    %v1613 = vsub.f32 %v1449, %v1525
    %v1614 = vsub.f32 %v1451, %v1562
    %v1615 = vsub.f32 %v1455, %v1525
    %v1616 = vsub.f32 %v1457, %v1562
    %v1617 = vsub.f32 %v1461, %v1525
    %v1618 = vsub.f32 %v1463, %v1562
    %v1619 = vsub.f32 %v1467, %v1525
    %v1620 = vsub.f32 %v1469, %v1562
    %v1621 = vsub.f32 %v1473, %v1525
    %v1622 = vsub.f32 %v1475, %v1562
    %v1623 = vsub.f32 %v1479, %v1525
    %v1624 = vsub.f32 %v1481, %v1562
    %v1625 = vsub.f32 %v1485, %v1525
    %v1626 = vsub.f32 %v1487, %v1562
    %v1627 = vmul.f32 %v1563, 1.442695
    %v1628 = vpow.pop %v1627
    %v1629 = vmul.f32 %v1564, 1.442695
    %v1630 = vpow.pop %v1629
    %v1631 = vmul.f32 %v1565, 1.442695
    %v1632 = vpow.pop %v1631
    %v1633 = vmul.f32 %v1566, 1.442695
    %v1634 = vpow.pop %v1633
    %v1635 = vmul.f32 %v1567, 1.442695
    %v1636 = vpow.pop %v1635
    %v1637 = vmul.f32 %v1568, 1.442695
    %v1638 = vpow.pop %v1637
    %v1639 = vmul.f32 %v1569, 1.442695
    %v1640 = vpow.pop %v1639
    %v1641 = vmul.f32 %v1570, 1.442695
    %v1642 = vpow.pop %v1641
    %v1643 = vmul.f32 %v1571, 1.442695
    %v1644 = vpow.pop %v1643
    %v1645 = vmul.f32 %v1572, 1.442695
    %v1646 = vpow.pop %v1645
    %v1647 = vmul.f32 %v1573, 1.442695
    %v1648 = vpow.pop %v1647
    %v1649 = vmul.f32 %v1574, 1.442695
    %v1650 = vpow.pop %v1649
    %v1651 = vmul.f32 %v1575, 1.442695
    %v1652 = vpow.pop %v1651
    %v1653 = vmul.f32 %v1576, 1.442695
    %v1654 = vpow.pop %v1653
    %v1655 = vmul.f32 %v1577, 1.442695
    %v1656 = vpow.pop %v1655
    %v1657 = vmul.f32 %v1578, 1.442695
    %v1658 = vpow.pop %v1657
    %v1659 = vmul.f32 %v1579, 1.442695
    %v1660 = vpow.pop %v1659
    %v1661 = vmul.f32 %v1580, 1.442695
    %v1662 = vpow.pop %v1661
    %v1663 = vmul.f32 %v1581, 1.442695
    %v1664 = vpow.pop %v1663
    %v1665 = vmul.f32 %v1582, 1.442695
    %v1666 = vpow.pop %v1665
    %v1667 = vmul.f32 %v1583, 1.442695
    %v1668 = vpow.pop %v1667
    %v1669 = vmul.f32 %v1584, 1.442695
    %v1670 = vpow.pop %v1669
    %v1671 = vmul.f32 %v1585, 1.442695
    %v1672 = vpow.pop %v1671
    %v1673 = vmul.f32 %v1586, 1.442695
    %v1674 = vpow.pop %v1673
    %v1675 = vmul.f32 %v1587, 1.442695
    %v1676 = vpow.pop %v1675
    %v1677 = vmul.f32 %v1588, 1.442695
    %v1678 = vpow.pop %v1677
    %v1679 = vmul.f32 %v1589, 1.442695
    %v1680 = vpow.pop %v1679
    %v1681 = vmul.f32 %v1590, 1.442695
    %v1682 = vpow.pop %v1681
    %v1683 = vmul.f32 %v1591, 1.442695
    %v1684 = vpow.pop %v1683
    %v1685 = vmul.f32 %v1592, 1.442695
    %v1686 = vpow.pop %v1685
    %v1687 = vmul.f32 %v1593, 1.442695
    %v1688 = vpow.pop %v1687
    %v1689 = vmul.f32 %v1594, 1.442695
    %v1690 = vpow.pop %v1689
    %v1691 = vmul.f32 %v1595, 1.442695
    %v1692 = vpow.pop %v1691
    %v1693 = vmul.f32 %v1596, 1.442695
    %v1694 = vpow.pop %v1693
    %v1695 = vmul.f32 %v1597, 1.442695
    %v1696 = vpow.pop %v1695
    %v1697 = vmul.f32 %v1598, 1.442695
    %v1698 = vpow.pop %v1697
    %v1699 = vmul.f32 %v1599, 1.442695
    %v1700 = vpow.pop %v1699
    %v1701 = vmul.f32 %v1600, 1.442695
    %v1702 = vpow.pop %v1701
    %v1703 = vmul.f32 %v1601, 1.442695
    %v1704 = vpow.pop %v1703
    %v1705 = vmul.f32 %v1602, 1.442695
    %v1706 = vpow.pop %v1705
    %v1707 = vmul.f32 %v1603, 1.442695
    %v1708 = vpow.pop %v1707
    %v1709 = vmul.f32 %v1604, 1.442695
    %v1710 = vpow.pop %v1709
    %v1711 = vmul.f32 %v1605, 1.442695
    %v1712 = vpow.pop %v1711
    %v1713 = vmul.f32 %v1606, 1.442695
    %v1714 = vpow.pop %v1713
    %v1715 = vmul.f32 %v1607, 1.442695
    %v1716 = vpow.pop %v1715
    %v1717 = vmul.f32 %v1608, 1.442695
    %v1718 = vpow.pop %v1717
    %v1719 = vmul.f32 %v1609, 1.442695
    %v1720 = vpow.pop %v1719
    %v1721 = vmul.f32 %v1610, 1.442695
    %v1722 = vpow.pop %v1721
    %v1723 = vmul.f32 %v1611, 1.442695
    %v1724 = vpow.pop %v1723
    %v1725 = vmul.f32 %v1612, 1.442695
    %v1726 = vpow.pop %v1725
    %v1727 = vmul.f32 %v1613, 1.442695
    %v1728 = vpow.pop %v1727
    %v1729 = vmul.f32 %v1614, 1.442695
    %v1730 = vpow.pop %v1729
    %v1731 = vmul.f32 %v1615, 1.442695
    %v1732 = vpow.pop %v1731
    %v1733 = vmul.f32 %v1616, 1.442695
    %v1734 = vpow.pop %v1733
    %v1735 = vmul.f32 %v1617, 1.442695
    %v1736 = vpow.pop %v1735
    %v1737 = vmul.f32 %v1618, 1.442695
    %v1738 = vpow.pop %v1737
    %v1739 = vmul.f32 %v1619, 1.442695
    %v1740 = vpow.pop %v1739
    %v1741 = vmul.f32 %v1620, 1.442695
    %v1742 = vpow.pop %v1741
    %v1743 = vmul.f32 %v1621, 1.442695
    %v1744 = vpow.pop %v1743
    %v1745 = vmul.f32 %v1622, 1.442695
    %v1746 = vpow.pop %v1745
    %v1747 = vmul.f32 %v1623, 1.442695
    %v1748 = vpow.pop %v1747
    %v1749 = vmul.f32 %v1624, 1.442695
    %v1750 = vpow.pop %v1749
    %v1751 = vmul.f32 %v1625, 1.442695
    %v1752 = vpow.pop %v1751
    %v1753 = vmul.f32 %v1626, 1.442695
    %v1754 = vpow.pop %v1753
    %s1755 = scalar_lea.vmem [#allocation7], 512
    %1756 = vst [vmem:[%s1755] sm:$0xff] %v1628
    %1757 = vst [vmem:[%s1755 + $0x8] sm:$0xff] %v1630
    %1758 = vst [vmem:[%s1755 + $0x10] sm:$0xff] %v1632
    %1759 = vst [vmem:[%s1755 + $0x18] sm:$0xff] %v1634
    %1760 = vst [vmem:[%s1755 + $0x20] sm:$0xff] %v1636
    %1761 = vst [vmem:[%s1755 + $0x28] sm:$0xff] %v1638
    %1762 = vst [vmem:[%s1755 + $0x30] sm:$0xff] %v1640
    %1763 = vst [vmem:[%s1755 + $0x38] sm:$0xff] %v1642
    %1764 = vst [vmem:[%s1755 + $0x40] sm:$0xff] %v1644
    %1765 = vst [vmem:[%s1755 + $0x48] sm:$0xff] %v1646
    %1766 = vst [vmem:[%s1755 + $0x50] sm:$0xff] %v1648
    %1767 = vst [vmem:[%s1755 + $0x58] sm:$0xff] %v1650
    %1768 = vst [vmem:[%s1755 + $0x60] sm:$0xff] %v1652
    %1769 = vst [vmem:[%s1755 + $0x68] sm:$0xff] %v1654
    %1770 = vst [vmem:[%s1755 + $0x70] sm:$0xff] %v1656
    %1771 = vst [vmem:[%s1755 + $0x78] sm:$0xff] %v1658
    %1772 = vst [vmem:[%s1755 + $0x80] sm:$0xff] %v1660
    %1773 = vst [vmem:[%s1755 + $0x88] sm:$0xff] %v1662
    %1774 = vst [vmem:[%s1755 + $0x90] sm:$0xff] %v1664
    %1775 = vst [vmem:[%s1755 + $0x98] sm:$0xff] %v1666
    %1776 = vst [vmem:[%s1755 + $0xa0] sm:$0xff] %v1668
    %1777 = vst [vmem:[%s1755 + $0xa8] sm:$0xff] %v1670
    %1778 = vst [vmem:[%s1755 + $0xb0] sm:$0xff] %v1672
    %1779 = vst [vmem:[%s1755 + $0xb8] sm:$0xff] %v1674
    %1780 = vst [vmem:[%s1755 + $0xc0] sm:$0xff] %v1676
    %1781 = vst [vmem:[%s1755 + $0xc8] sm:$0xff] %v1678
    %1782 = vst [vmem:[%s1755 + $0xd0] sm:$0xff] %v1680
    %1783 = vst [vmem:[%s1755 + $0xd8] sm:$0xff] %v1682
    %1784 = vst [vmem:[%s1755 + $0xe0] sm:$0xff] %v1684
    %1785 = vst [vmem:[%s1755 + $0xe8] sm:$0xff] %v1686
    %1786 = vst [vmem:[%s1755 + $0xf0] sm:$0xff] %v1688
    %1787 = vst [vmem:[%s1755 + $0xf8] sm:$0xff] %v1690
    %1788 = vst [vmem:[%s1755 + $0x100] sm:$0xff] %v1692
    %1789 = vst [vmem:[%s1755 + $0x108] sm:$0xff] %v1694
    %1790 = vst [vmem:[%s1755 + $0x110] sm:$0xff] %v1696
    %1791 = vst [vmem:[%s1755 + $0x118] sm:$0xff] %v1698
    %1792 = vst [vmem:[%s1755 + $0x120] sm:$0xff] %v1700
    %1793 = vst [vmem:[%s1755 + $0x128] sm:$0xff] %v1702
    %1794 = vst [vmem:[%s1755 + $0x130] sm:$0xff] %v1704
    %1795 = vst [vmem:[%s1755 + $0x138] sm:$0xff] %v1706
    %1796 = vst [vmem:[%s1755 + $0x140] sm:$0xff] %v1708
    %1797 = vst [vmem:[%s1755 + $0x148] sm:$0xff] %v1710
    %1798 = vst [vmem:[%s1755 + $0x150] sm:$0xff] %v1712
    %1799 = vst [vmem:[%s1755 + $0x158] sm:$0xff] %v1714
    %1800 = vst [vmem:[%s1755 + $0x160] sm:$0xff] %v1716
    %1801 = vst [vmem:[%s1755 + $0x168] sm:$0xff] %v1718
    %1802 = vst [vmem:[%s1755 + $0x170] sm:$0xff] %v1720
    %1803 = vst [vmem:[%s1755 + $0x178] sm:$0xff] %v1722
    %1804 = vst [vmem:[%s1755 + $0x180] sm:$0xff] %v1724
    %1805 = vst [vmem:[%s1755 + $0x188] sm:$0xff] %v1726
    %1806 = vst [vmem:[%s1755 + $0x190] sm:$0xff] %v1728
    %1807 = vst [vmem:[%s1755 + $0x198] sm:$0xff] %v1730
    %1808 = vst [vmem:[%s1755 + $0x1a0] sm:$0xff] %v1732
    %1809 = vst [vmem:[%s1755 + $0x1a8] sm:$0xff] %v1734
    %1810 = vst [vmem:[%s1755 + $0x1b0] sm:$0xff] %v1736
    %1811 = vst [vmem:[%s1755 + $0x1b8] sm:$0xff] %v1738
    %1812 = vst [vmem:[%s1755 + $0x1c0] sm:$0xff] %v1740
    %1813 = vst [vmem:[%s1755 + $0x1c8] sm:$0xff] %v1742
    %1814 = vst [vmem:[%s1755 + $0x1d0] sm:$0xff] %v1744
    %1815 = vst [vmem:[%s1755 + $0x1d8] sm:$0xff] %v1746
    %1816 = vst [vmem:[%s1755 + $0x1e0] sm:$0xff] %v1748
    %1817 = vst [vmem:[%s1755 + $0x1e8] sm:$0xff] %v1750
    %1818 = vst [vmem:[%s1755 + $0x1f0] sm:$0xff] %v1752
    %1819 = vst [vmem:[%s1755 + $0x1f8] sm:$0xff] %v1754
    %v1820 = vld [vmem:[%s1755] sm:$0xff]
    %v1821 = vld [vmem:[%s1755 + $0x8] sm:$0xff]
    %v1822 = vld [vmem:[%s1755 + $0x10] sm:$0xff]
    %v1823 = vld [vmem:[%s1755 + $0x18] sm:$0xff]
    %v1824 = vld [vmem:[%s1755 + $0x20] sm:$0xff]
    %v1825 = vld [vmem:[%s1755 + $0x28] sm:$0xff]
    %v1826 = vld [vmem:[%s1755 + $0x30] sm:$0xff]
    %v1827 = vld [vmem:[%s1755 + $0x38] sm:$0xff]
    %v1828 = vld [vmem:[%s1755 + $0x40] sm:$0xff]
    %v1829 = vld [vmem:[%s1755 + $0x48] sm:$0xff]
    %v1830 = vld [vmem:[%s1755 + $0x50] sm:$0xff]
    %v1831 = vld [vmem:[%s1755 + $0x58] sm:$0xff]
    %v1832 = vld [vmem:[%s1755 + $0x60] sm:$0xff]
    %v1833 = vld [vmem:[%s1755 + $0x68] sm:$0xff]
    %v1834 = vld [vmem:[%s1755 + $0x70] sm:$0xff]
    %v1835 = vld [vmem:[%s1755 + $0x78] sm:$0xff]
    %v1836 = vld [vmem:[%s1755 + $0x80] sm:$0xff]
    %v1837 = vld [vmem:[%s1755 + $0x88] sm:$0xff]
    %v1838 = vld [vmem:[%s1755 + $0x90] sm:$0xff]
    %v1839 = vld [vmem:[%s1755 + $0x98] sm:$0xff]
    %v1840 = vld [vmem:[%s1755 + $0xa0] sm:$0xff]
    %v1841 = vld [vmem:[%s1755 + $0xa8] sm:$0xff]
    %v1842 = vld [vmem:[%s1755 + $0xb0] sm:$0xff]
    %v1843 = vld [vmem:[%s1755 + $0xb8] sm:$0xff]
    %v1844 = vld [vmem:[%s1755 + $0xc0] sm:$0xff]
    %v1845 = vld [vmem:[%s1755 + $0xc8] sm:$0xff]
    %v1846 = vld [vmem:[%s1755 + $0xd0] sm:$0xff]
    %v1847 = vld [vmem:[%s1755 + $0xd8] sm:$0xff]
    %v1848 = vld [vmem:[%s1755 + $0xe0] sm:$0xff]
    %v1849 = vld [vmem:[%s1755 + $0xe8] sm:$0xff]
    %v1850 = vld [vmem:[%s1755 + $0xf0] sm:$0xff]
    %v1851 = vld [vmem:[%s1755 + $0xf8] sm:$0xff]
    %v1852 = vld [vmem:[%s1755 + $0x100] sm:$0xff]
    %v1853 = vld [vmem:[%s1755 + $0x108] sm:$0xff]
    %v1854 = vld [vmem:[%s1755 + $0x110] sm:$0xff]
    %v1855 = vld [vmem:[%s1755 + $0x118] sm:$0xff]
    %v1856 = vld [vmem:[%s1755 + $0x120] sm:$0xff]
    %v1857 = vld [vmem:[%s1755 + $0x128] sm:$0xff]
    %v1858 = vld [vmem:[%s1755 + $0x130] sm:$0xff]
    %v1859 = vld [vmem:[%s1755 + $0x138] sm:$0xff]
    %v1860 = vld [vmem:[%s1755 + $0x140] sm:$0xff]
    %v1861 = vld [vmem:[%s1755 + $0x148] sm:$0xff]
    %v1862 = vld [vmem:[%s1755 + $0x150] sm:$0xff]
    %v1863 = vld [vmem:[%s1755 + $0x158] sm:$0xff]
    %v1864 = vld [vmem:[%s1755 + $0x160] sm:$0xff]
    %v1865 = vld [vmem:[%s1755 + $0x168] sm:$0xff]
    %v1866 = vld [vmem:[%s1755 + $0x170] sm:$0xff]
    %v1867 = vld [vmem:[%s1755 + $0x178] sm:$0xff]
    %v1868 = vld [vmem:[%s1755 + $0x180] sm:$0xff]
    %v1869 = vld [vmem:[%s1755 + $0x188] sm:$0xff]
    %v1870 = vld [vmem:[%s1755 + $0x190] sm:$0xff]
    %v1871 = vld [vmem:[%s1755 + $0x198] sm:$0xff]
    %v1872 = vld [vmem:[%s1755 + $0x1a0] sm:$0xff]
    %v1873 = vld [vmem:[%s1755 + $0x1a8] sm:$0xff]
    %v1874 = vld [vmem:[%s1755 + $0x1b0] sm:$0xff]
    %v1875 = vld [vmem:[%s1755 + $0x1b8] sm:$0xff]
    %v1876 = vld [vmem:[%s1755 + $0x1c0] sm:$0xff]
    %v1877 = vld [vmem:[%s1755 + $0x1c8] sm:$0xff]
    %v1878 = vld [vmem:[%s1755 + $0x1d0] sm:$0xff]
    %v1879 = vld [vmem:[%s1755 + $0x1d8] sm:$0xff]
    %v1880 = vld [vmem:[%s1755 + $0x1e0] sm:$0xff]
    %v1881 = vld [vmem:[%s1755 + $0x1e8] sm:$0xff]
    %v1882 = vld [vmem:[%s1755 + $0x1f0] sm:$0xff]
    %v1883 = vld [vmem:[%s1755 + $0x1f8] sm:$0xff]
    %v1884 = vadd.f32 %v1820, %v1822
    %v1885 = vadd.f32 %v1884, %v1824
    %v1886 = vadd.f32 %v1885, %v1826
    %v1887 = vadd.f32 %v1886, %v1828
    %v1888 = vadd.f32 %v1887, %v1830
    %v1889 = vadd.f32 %v1888, %v1832
    %v1890 = vadd.f32 %v1889, %v1834
    %v1891 = vadd.f32 %v1890, %v1836
    %v1892 = vadd.f32 %v1891, %v1838
    %v1893 = vadd.f32 %v1892, %v1840
    %v1894 = vadd.f32 %v1893, %v1842
    %v1895 = vadd.f32 %v1894, %v1844
    %v1896 = vadd.f32 %v1895, %v1846
    %v1897 = vadd.f32 %v1896, %v1848
    %v1898 = vadd.f32 %v1897, %v1850
    %v1899 = vadd.f32 %v1898, %v1852
    %v1900 = vadd.f32 %v1899, %v1854
    %v1901 = vadd.f32 %v1900, %v1856
    %v1902 = vadd.f32 %v1901, %v1858
    %v1903 = vadd.f32 %v1902, %v1860
    %v1904 = vadd.f32 %v1903, %v1862
    %v1905 = vadd.f32 %v1904, %v1864
    %v1906 = vadd.f32 %v1905, %v1866
    %v1907 = vadd.f32 %v1906, %v1868
    %v1908 = vadd.f32 %v1907, %v1870
    %v1909 = vadd.f32 %v1908, %v1872
    %v1910 = vadd.f32 %v1909, %v1874
    %v1911 = vadd.f32 %v1910, %v1876
    %v1912 = vadd.f32 %v1911, %v1878
    %v1913 = vadd.f32 %v1912, %v1880
    %v1914 = vadd.f32 %v1913, %v1882
    %v1915 = vrot.slane %v1914, 4
    %v1916 = vadd.f32 %v1914, %v1915
    %v1917 = vrot.slane %v1916, 2
    %v1918 = vadd.f32 %v1916, %v1917
    %v1919 = vrot.slane %v1918, 1
    %v1920 = vadd.f32 %v1918, %v1919
    %v1921 = vadd.f32 %v1821, %v1823
    %v1922 = vadd.f32 %v1921, %v1825
    %v1923 = vadd.f32 %v1922, %v1827
    %v1924 = vadd.f32 %v1923, %v1829
    %v1925 = vadd.f32 %v1924, %v1831
    %v1926 = vadd.f32 %v1925, %v1833
    %v1927 = vadd.f32 %v1926, %v1835
    %v1928 = vadd.f32 %v1927, %v1837
    %v1929 = vadd.f32 %v1928, %v1839
    %v1930 = vadd.f32 %v1929, %v1841
    %v1931 = vadd.f32 %v1930, %v1843
    %v1932 = vadd.f32 %v1931, %v1845
    %v1933 = vadd.f32 %v1932, %v1847
    %v1934 = vadd.f32 %v1933, %v1849
    %v1935 = vadd.f32 %v1934, %v1851
    %v1936 = vadd.f32 %v1935, %v1853
    %v1937 = vadd.f32 %v1936, %v1855
    %v1938 = vadd.f32 %v1937, %v1857
    %v1939 = vadd.f32 %v1938, %v1859
    %v1940 = vadd.f32 %v1939, %v1861
    %v1941 = vadd.f32 %v1940, %v1863
    %v1942 = vadd.f32 %v1941, %v1865
    %v1943 = vadd.f32 %v1942, %v1867
    %v1944 = vadd.f32 %v1943, %v1869
    %v1945 = vadd.f32 %v1944, %v1871
    %v1946 = vadd.f32 %v1945, %v1873
    %v1947 = vadd.f32 %v1946, %v1875
    %v1948 = vadd.f32 %v1947, %v1877
    %v1949 = vadd.f32 %v1948, %v1879
    %v1950 = vadd.f32 %v1949, %v1881
    %v1951 = vadd.f32 %v1950, %v1883
    %v1952 = vrot.slane %v1951, 4
    %v1953 = vadd.f32 %v1951, %v1952
    %v1954 = vrot.slane %v1953, 2
    %v1955 = vadd.f32 %v1953, %v1954
    %v1956 = vrot.slane %v1955, 1
    %v1957 = vadd.f32 %v1955, %v1956
    %v1958 = vrcp.pop %v1920
    %v1959 = vrcp.pop %v1957
    %v1960 = vmul.f32 %v1920, %v1958
    %v1961 = vmul.f32 %v1957, %v1959
    %v1962 = vsub.f32 2.0, %v1960
    %v1963 = vsub.f32 2.0, %v1961
    %v1964 = vmul.f32 %v1958, %v1962
    %v1965 = vmul.f32 %v1959, %v1963
    %v1966 = vmul.f32 %v1820, %v1964
    %v1967 = vmul.f32 %v1821, %v1965
    %v1968 = vmul.f32 %v1822, %v1964
    %v1969 = vmul.f32 %v1823, %v1965
    %v1970 = vmul.f32 %v1824, %v1964
    %v1971 = vmul.f32 %v1825, %v1965
    %v1972 = vmul.f32 %v1826, %v1964
    %v1973 = vmul.f32 %v1827, %v1965
    %v1974 = vmul.f32 %v1828, %v1964
    %v1975 = vmul.f32 %v1829, %v1965
    %v1976 = vmul.f32 %v1830, %v1964
    %v1977 = vmul.f32 %v1831, %v1965
    %v1978 = vmul.f32 %v1832, %v1964
    %v1979 = vmul.f32 %v1833, %v1965
    %v1980 = vmul.f32 %v1834, %v1964
    %v1981 = vmul.f32 %v1835, %v1965
    %v1982 = vmul.f32 %v1836, %v1964
    %v1983 = vmul.f32 %v1837, %v1965
    %v1984 = vmul.f32 %v1838, %v1964
    %v1985 = vmul.f32 %v1839, %v1965
    %v1986 = vmul.f32 %v1840, %v1964
    %v1987 = vmul.f32 %v1841, %v1965
    %v1988 = vmul.f32 %v1842, %v1964
    %v1989 = vmul.f32 %v1843, %v1965
    %v1990 = vmul.f32 %v1844, %v1964
    %v1991 = vmul.f32 %v1845, %v1965
    %v1992 = vmul.f32 %v1846, %v1964
    %v1993 = vmul.f32 %v1847, %v1965
    %v1994 = vmul.f32 %v1848, %v1964
    %v1995 = vmul.f32 %v1849, %v1965
    %v1996 = vmul.f32 %v1850, %v1964
    %v1997 = vmul.f32 %v1851, %v1965
    %v1998 = vmul.f32 %v1852, %v1964
    %v1999 = vmul.f32 %v1853, %v1965
    %v2000 = vmul.f32 %v1854, %v1964
    %v2001 = vmul.f32 %v1855, %v1965
    %v2002 = vmul.f32 %v1856, %v1964
    %v2003 = vmul.f32 %v1857, %v1965
    %v2004 = vmul.f32 %v1858, %v1964
    %v2005 = vmul.f32 %v1859, %v1965
    %v2006 = vmul.f32 %v1860, %v1964
    %v2007 = vmul.f32 %v1861, %v1965
    %v2008 = vmul.f32 %v1862, %v1964
    %v2009 = vmul.f32 %v1863, %v1965
    %v2010 = vmul.f32 %v1864, %v1964
    %v2011 = vmul.f32 %v1865, %v1965
    %v2012 = vmul.f32 %v1866, %v1964
    %v2013 = vmul.f32 %v1867, %v1965
    %v2014 = vmul.f32 %v1868, %v1964
    %v2015 = vmul.f32 %v1869, %v1965
    %v2016 = vmul.f32 %v1870, %v1964
    %v2017 = vmul.f32 %v1871, %v1965
    %v2018 = vmul.f32 %v1872, %v1964
    %v2019 = vmul.f32 %v1873, %v1965
    %v2020 = vmul.f32 %v1874, %v1964
    %v2021 = vmul.f32 %v1875, %v1965
    %v2022 = vmul.f32 %v1876, %v1964
    %v2023 = vmul.f32 %v1877, %v1965
    %v2024 = vmul.f32 %v1878, %v1964
    %v2025 = vmul.f32 %v1879, %v1965
    %v2026 = vmul.f32 %v1880, %v1964
    %v2027 = vmul.f32 %v1881, %v1965
    %v2028 = vmul.f32 %v1882, %v1964
    %v2029 = vmul.f32 %v1883, %v1965
    %2030 = vst [vmem:[%s1755] sm:$0xff] %v1966
    %2031 = vst [vmem:[%s1755 + $0x8] sm:$0xff] %v1967
    %2032 = vst [vmem:[%s1755 + $0x10] sm:$0xff] %v1968
    %2033 = vst [vmem:[%s1755 + $0x18] sm:$0xff] %v1969
    %2034 = vst [vmem:[%s1755 + $0x20] sm:$0xff] %v1970
    %2035 = vst [vmem:[%s1755 + $0x28] sm:$0xff] %v1971
    %2036 = vst [vmem:[%s1755 + $0x30] sm:$0xff] %v1972
    %2037 = vst [vmem:[%s1755 + $0x38] sm:$0xff] %v1973
    %2038 = vst [vmem:[%s1755 + $0x40] sm:$0xff] %v1974
    %2039 = vst [vmem:[%s1755 + $0x48] sm:$0xff] %v1975
    %2040 = vst [vmem:[%s1755 + $0x50] sm:$0xff] %v1976
    %2041 = vst [vmem:[%s1755 + $0x58] sm:$0xff] %v1977
    %2042 = vst [vmem:[%s1755 + $0x60] sm:$0xff] %v1978
    %2043 = vst [vmem:[%s1755 + $0x68] sm:$0xff] %v1979
    %2044 = vst [vmem:[%s1755 + $0x70] sm:$0xff] %v1980
    %2045 = vst [vmem:[%s1755 + $0x78] sm:$0xff] %v1981
    %2046 = vst [vmem:[%s1755 + $0x80] sm:$0xff] %v1982
    %2047 = vst [vmem:[%s1755 + $0x88] sm:$0xff] %v1983
    %2048 = vst [vmem:[%s1755 + $0x90] sm:$0xff] %v1984
    %2049 = vst [vmem:[%s1755 + $0x98] sm:$0xff] %v1985
    %2050 = vst [vmem:[%s1755 + $0xa0] sm:$0xff] %v1986
    %2051 = vst [vmem:[%s1755 + $0xa8] sm:$0xff] %v1987
    %2052 = vst [vmem:[%s1755 + $0xb0] sm:$0xff] %v1988
    %2053 = vst [vmem:[%s1755 + $0xb8] sm:$0xff] %v1989
    %2054 = vst [vmem:[%s1755 + $0xc0] sm:$0xff] %v1990
    %2055 = vst [vmem:[%s1755 + $0xc8] sm:$0xff] %v1991
    %2056 = vst [vmem:[%s1755 + $0xd0] sm:$0xff] %v1992
    %2057 = vst [vmem:[%s1755 + $0xd8] sm:$0xff] %v1993
    %2058 = vst [vmem:[%s1755 + $0xe0] sm:$0xff] %v1994
    %2059 = vst [vmem:[%s1755 + $0xe8] sm:$0xff] %v1995
    %2060 = vst [vmem:[%s1755 + $0xf0] sm:$0xff] %v1996
    %2061 = vst [vmem:[%s1755 + $0xf8] sm:$0xff] %v1997
    %2062 = vst [vmem:[%s1755 + $0x100] sm:$0xff] %v1998
    %2063 = vst [vmem:[%s1755 + $0x108] sm:$0xff] %v1999
    %2064 = vst [vmem:[%s1755 + $0x110] sm:$0xff] %v2000
    %2065 = vst [vmem:[%s1755 + $0x118] sm:$0xff] %v2001
    %2066 = vst [vmem:[%s1755 + $0x120] sm:$0xff] %v2002
    %2067 = vst [vmem:[%s1755 + $0x128] sm:$0xff] %v2003
    %2068 = vst [vmem:[%s1755 + $0x130] sm:$0xff] %v2004
    %2069 = vst [vmem:[%s1755 + $0x138] sm:$0xff] %v2005
    %2070 = vst [vmem:[%s1755 + $0x140] sm:$0xff] %v2006
    %2071 = vst [vmem:[%s1755 + $0x148] sm:$0xff] %v2007
    %2072 = vst [vmem:[%s1755 + $0x150] sm:$0xff] %v2008
    %2073 = vst [vmem:[%s1755 + $0x158] sm:$0xff] %v2009
    %2074 = vst [vmem:[%s1755 + $0x160] sm:$0xff] %v2010
    %2075 = vst [vmem:[%s1755 + $0x168] sm:$0xff] %v2011
    %2076 = vst [vmem:[%s1755 + $0x170] sm:$0xff] %v2012
    %2077 = vst [vmem:[%s1755 + $0x178] sm:$0xff] %v2013
    %2078 = vst [vmem:[%s1755 + $0x180] sm:$0xff] %v2014
    %2079 = vst [vmem:[%s1755 + $0x188] sm:$0xff] %v2015
    %2080 = vst [vmem:[%s1755 + $0x190] sm:$0xff] %v2016
    %2081 = vst [vmem:[%s1755 + $0x198] sm:$0xff] %v2017
    %2082 = vst [vmem:[%s1755 + $0x1a0] sm:$0xff] %v2018
    %2083 = vst [vmem:[%s1755 + $0x1a8] sm:$0xff] %v2019
    %2084 = vst [vmem:[%s1755 + $0x1b0] sm:$0xff] %v2020
    %2085 = vst [vmem:[%s1755 + $0x1b8] sm:$0xff] %v2021
    %2086 = vst [vmem:[%s1755 + $0x1c0] sm:$0xff] %v2022
    %2087 = vst [vmem:[%s1755 + $0x1c8] sm:$0xff] %v2023
    %2088 = vst [vmem:[%s1755 + $0x1d0] sm:$0xff] %v2024
    %2089 = vst [vmem:[%s1755 + $0x1d8] sm:$0xff] %v2025
    %2090 = vst [vmem:[%s1755 + $0x1e0] sm:$0xff] %v2026
    %2091 = vst [vmem:[%s1755 + $0x1e8] sm:$0xff] %v2027
    %2092 = vst [vmem:[%s1755 + $0x1f0] sm:$0xff] %v2028
    %2093 = vst [vmem:[%s1755 + $0x1f8] sm:$0xff] %v2029
    // Predicated region
    $region18: #{tpu_custom_call.1} parent=1 // pred_check
      _
    $region19: #{tpu_custom_call.1} parent=1 // pred_check_branch
      %2095 = sbr.rel (0) target = $region21
    $region20: #{tpu_custom_call.1} parent=1 // pred_region
      %s2097 = ssub.s32 16384, 16384
      %2098 = vsyncadd [#allocation4], %s2097
      %s2099 = sshll.u32 [#allocation7], 4
      %s2100 = int_to_ptr.vmem [resolvable:$true] %s2099
      %2105 = dma.vmem_to_hbm [thread:$0]  %s2100, 16384, %s2, [#allocation4], 256, 256, 16
    $region21: #{tpu_custom_call.1} parent=1 // pred_fallthru
      _
    // Predicated region
    $region22: #{tpu_custom_call.1} parent=1 // pred_check
      _
    $region23: #{tpu_custom_call.1} parent=1 // pred_check_branch
      %2107 = sbr.rel (0) target = $region25
    $region24: #{tpu_custom_call.1} parent=1 // pred_region
      %2108 = dma.done [#allocation4], 16384
    $region25: #{tpu_custom_call.1} parent=1 // pred_fallthru
      _
    %2109 = vsyncpa [#allocation3], 1
    %2110 = vsyncpa [#allocation6], 1
    %2111 = vsyncpa [#allocation4], 1

</llo_original>
